<compile_context>
chip_gen: v5e
topology: v5e:2x2
jax: 0.10.0
libtpu: 0.0.40
codegen_flags: <defaults>
</compile_context>

<pallas_src>
import functools
import math

import jax
import jax.numpy as jnp
from jax import lax
from jax.experimental import pallas as pl
from jax.experimental.pallas import tpu as pltpu


def _layer_norm(x, gamma, beta, eps=1e-5):
    # LayerNorm over last dim, biased variance (PyTorch semantics), f32 stats.
    mean = jnp.mean(x, axis=-1, keepdims=True)
    xc = x - mean
    var = jnp.mean(xc * xc, axis=-1, keepdims=True)
    return xc * lax.rsqrt(var + eps) * gamma + beta


def encoder_kernel(x_ref, pos_ref, tim_ref,
                   wqkv_ref, wo_ref, bo_ref, g1_ref, b1_ref,
                   w1_ref, bf1_ref, w2_ref, bf2_ref, g2_ref, b2_ref,
                   o_ref, *, heads, head_dim, seq, embed, nb):
    S, E, H, D = seq, embed, heads, head_dim
    R = nb * S
    bf16 = jnp.bfloat16
    l = pl.program_id(1)

    # Layer 0 of each batch block: initialize the activation carry with
    # postim = positions + times (dropout is identity in eval mode).
    @pl.when(l == 0)
    def _():
        o_ref[...] = x_ref[...] + pos_ref[...] + tim_ref[...]

    cur = o_ref[...]                              # (nb, S, E) f32 carry
    cur2d = cur.reshape(R, E)

    # --- Self-attention -------------------------------------------------
    # Fused Q/K/V projection: one lane-dense (R, E) @ (E, 3E) MXU matmul,
    # bf16 inputs, f32 accumulation.  1/sqrt(embed_size) is folded into Q.
    qkv = jnp.dot(cur2d.astype(bf16), wqkv_ref[0],
                  preferred_element_type=jnp.float32)        # (R, 3E) f32

    # Single head split: (R, 3E) -> (nb, S, 3H, D) -> (nb, 3H, S, D).
    # One XLU transpose replaces the 3*nb*H lane slices + stacks of v1.
    qkv_h = jnp.transpose(qkv.reshape(nb, S, 3 * H, D), (0, 2, 1, 3))
    qh = qkv_h[:, 0 * H:1 * H].reshape(nb * H, S, D)
    kh = qkv_h[:, 1 * H:2 * H].reshape(nb * H, S, D)
    vh = qkv_h[:, 2 * H:3 * H].reshape(nb * H, S, D)

    # Batched attention over (batch*heads); mask is None on this typ path.
    energy = jnp.einsum('bqd,bkd->bqk',
                        qh.astype(bf16), kh.astype(bf16),
                        preferred_element_type=jnp.float32)  # (nb*H, S, S)
    energy = energy - jnp.max(energy, axis=-1, keepdims=True)
    p = jnp.exp(energy)
    p = p * pl.reciprocal(jnp.sum(p, axis=-1, keepdims=True), approx=True)
    ah = jnp.einsum('bqk,bkd->bqd',
                    p.astype(bf16), vh.astype(bf16),
                    preferred_element_type=jnp.float32)      # (nb*H, S, D)

    # Head merge = inverse transpose (no per-head lane concats), then fc_out.
    ahm = jnp.transpose(ah.reshape(nb, H, S, D), (0, 2, 1, 3)).reshape(R, E)
    attn = jnp.dot(ahm.astype(bf16), wo_ref[0],
                   preferred_element_type=jnp.float32) + bo_ref[0]

    # residual + LayerNorm 1 (dropout identity in eval)
    x1 = _layer_norm(attn + cur2d, g1_ref[0], b1_ref[0])

    # --- Feed-forward: Linear -> ReLU -> Linear --------------------------
    h1 = jnp.maximum(
        jnp.dot(x1.astype(bf16), w1_ref[0],
                preferred_element_type=jnp.float32) + bf1_ref[0], 0.0)
    ff = jnp.dot(h1.astype(bf16), w2_ref[0],
                 preferred_element_type=jnp.float32) + bf2_ref[0]

    # residual + LayerNorm 2 -> new activation carry
    out = _layer_norm(ff + x1, g2_ref[0], b2_ref[0])
    o_ref[...] = out.reshape(nb, S, E)


def _default_num_batch_blocks(N, S):
    """G=2 only helps on 2-TensorCore chips (v7x) and only when each block
    still has a healthy sublane-row count; otherwise one block per step feeds
    the MXU better (always on v5e/v6e, and on v7x at small batch*seq)."""
    if N % 2 != 0:
        return 1
    try:
        kind = jax.devices()[0].device_kind.lower()
    except Exception:  # pragma: no cover - defensive
        kind = ""
    has_two_cores = ("v7" in kind) or ("tpu7" in kind) or ("7x" in kind)
    rows_per_block = (N // 2) * S
    if has_two_cores and rows_per_block >= 128 and rows_per_block % 8 == 0:
        return 2
    return 1


def _vmem_limit_bytes(E, F, nb, S):
    """Weights are streamed per layer (double-buffered), activation block is
    resident; budget from actual shapes instead of a fixed constant."""
    bf16, f32 = 2, 4
    w_layer = (3 * E * E + E * E + E * F + F * E) * bf16 + (6 * E + F) * f32
    act_blk = nb * S * E * f32
    total = 2 * w_layer + 6 * act_blk + 2 * act_blk + (8 << 20)  # + headroom
    return int(min(max(total, 16 << 20), 64 << 20))  # 64 MiB = v7x physical


def encoder_forward(x, positions, times, params, *, heads,
                    num_batch_blocks=None):
    """Encoder.forward: typ=2 path (postim = positions + times), mask=None,
    layers_out=1, dropout in eval mode (identity). One fused pallas_call with
    layer-streamed weights."""
    N, S, E = x.shape
    L = params["wqkv"].shape[0]
    F = params["w1"].shape[2]

    if num_batch_blocks is None:
        num_batch_blocks = _default_num_batch_blocks(N, S)
    G = num_batch_blocks
    assert N % G == 0, "batch must divide num_batch_blocks"
    Nb = N // G

    kernel = functools.partial(
        encoder_kernel, heads=heads, head_dim=E // heads,
        seq=S, embed=E, nb=Nb)

    # Activation blocks: constant over the layer axis (no re-DMA), indexed by
    # the batch-block axis.
    data_spec = pl.BlockSpec((Nb, S, E), lambda g, l: (g, 0, 0))

    # Per-layer weight slices: streamed along the trailing "arbitrary" axis so
    # only ~2 layers of weights are ever VMEM-resident.
    def wspec(trailing_shape):
        nd = len(trailing_shape)
        return pl.BlockSpec((1,) + trailing_shape,
                            lambda g, l, _nd=nd: (l,) + (0,) * _nd)

    in_specs = [
        data_spec,                 # x
        data_spec,                 # positions
        data_spec,                 # times
        wspec((E, 3 * E)),         # fused QKV (block-diag per head, scaled Q)
        wspec((E, E)),             # wo (transposed for x @ W)
        wspec((1, E)),             # bo
        wspec((1, E)),             # ln1 gamma
        wspec((1, E)),             # ln1 beta
        wspec((E, F)),             # ffn w1 (transposed)
        wspec((1, F)),             # ffn b1
        wspec((F, E)),             # ffn w2 (transposed)
        wspec((1, E)),             # ffn b2
        wspec((1, E)),             # ln2 gamma
        wspec((1, E)),             # ln2 beta
    ]

    return pl.pallas_call(
        kernel,
        grid=(G, L),
        in_specs=in_specs,
        out_specs=data_spec,       # same block index across l -> carry
        out_shape=jax.ShapeDtypeStruct((N, S, E), jnp.float32),
        compiler_params=pltpu.CompilerParams(
            dimension_semantics=("parallel", "arbitrary"),
            vmem_limit_bytes=_vmem_limit_bytes(E, F, Nb, S)),
    )(x, positions, times,
      params["wqkv"], params["wo"], params["bo"],
      params["g1"], params["b1"],
      params["w1"], params["bf1"], params["w2"], params["bf2"],
      params["g2"], params["b2"])


def init_encoder_params(key, *, embed_size, heads, forward_expansion,
                        num_layers):
    E = embed_size
    D = E // heads
    F = forward_expansion * E
    scale = 1.0 / math.sqrt(float(E))  # reference uses sqrt(embed), not head_dim

    def blockdiag(w_dd):
        # nn.Linear(D, D) with weight w (D, D): y = x @ w.T, shared across
        # heads  ->  full (E, E) block-diagonal matrix for x @ W.
        # NOTE: for production E > 128 prefer projecting in head-major layout
        # with the shared (D, 3D) weight instead of materializing the
        # (H-1)/H-zero block-diagonal matrix (H-fold FLOP/VMEM inflation).
        return jnp.kron(jnp.eye(heads, dtype=jnp.float32), w_dd.T)

    keys = ("wqkv", "wo", "bo", "g1", "b1", "w1", "bf1", "w2", "bf2",
            "g2", "b2")
    stacked = {k: [] for k in keys}
    for _ in range(num_layers):
        key, k0, k1, k2, k3, k4, k5, k6, k7, k8 = jax.random.split(key, 10)
        wv = jax.random.normal(k0, (D, D), jnp.float32) * 0.1
        wk = jax.random.normal(k1, (D, D), jnp.float32) * 0.1
        wq = jax.random.normal(k2, (D, D), jnp.float32) * 0.1
        wo = jax.random.normal(k3, (E, E), jnp.float32) * 0.1
        bo = jax.random.normal(k4, (1, E), jnp.float32) * 0.1
        w1 = jax.random.normal(k5, (F, E), jnp.float32) * 0.1
        bf1 = jax.random.normal(k6, (1, F), jnp.float32) * 0.1
        w2 = jax.random.normal(k7, (E, F), jnp.float32) * 0.1
        bf2 = jax.random.normal(k8, (1, E), jnp.float32) * 0.1

        # Fused QKV weight (E, 3E); softmax scale constant-folded into Q only.
        wqkv = jnp.concatenate(
            [blockdiag(wq) * scale, blockdiag(wk), blockdiag(wv)], axis=1)

        stacked["wqkv"].append(wqkv)
        stacked["wo"].append(wo.T)
        stacked["bo"].append(bo)
        stacked["g1"].append(jnp.ones((1, E), jnp.float32))
        stacked["b1"].append(jnp.zeros((1, E), jnp.float32))
        stacked["w1"].append(w1.T)
        stacked["bf1"].append(bf1)
        stacked["w2"].append(w2.T)
        stacked["bf2"].append(bf2)
        stacked["g2"].append(jnp.ones((1, E), jnp.float32))
        stacked["b2"].append(jnp.zeros((1, E), jnp.float32))

    out = {k: jnp.stack(v, axis=0) for k, v in stacked.items()}
    # Matmul weights in bf16 (MXU inputs); biases / LayerNorm params stay f32.
    for k in ("wqkv", "wo", "w1", "w2"):
        out[k] = out[k].astype(jnp.bfloat16)
    return out


if __name__ == "__main__":
    # TODO(synk): word_embedding / position_embedding layers exist in __init__
    # but are unused on this typ path, so they are not materialized.
    N, S, E = 2, 8, 32
    heads = 4
    forward_expansion = 4
    num_layers = 2

    key = jax.random.PRNGKey(0)
    key, kx, kp, kt = jax.random.split(key, 4)
    x = jax.random.normal(kx, (N, S, E), jnp.float32)
    positions = jax.random.normal(kp, (N, S, E), jnp.float32)
    times = jax.random.normal(kt, (N, S, E), jnp.float32)

    params = init_encoder_params(key, embed_size=E, heads=heads,
                                 forward_expansion=forward_expansion,
                                 num_layers=num_layers)

    out = encoder_forward(x, positions, times, params, heads=heads)
    out = jax.block_until_ready(out)
    assert out.shape == (N, S, E) and out.dtype == jnp.float32
    assert bool(jnp.all(jnp.isfinite(out)))
    print("KERNEL_OK")
</pallas_src>

<mosaic_0001>
module attributes {stable_mosaic.version = 11 : i64} {
  func.func @encoder_kernel(%arg0: i32, %arg1: i32, %arg2: memref<2x8x32xf32, #tpu.memory_space<vmem>>, %arg3: memref<2x8x32xf32, #tpu.memory_space<vmem>>, %arg4: memref<2x8x32xf32, #tpu.memory_space<vmem>>, %arg5: memref<1x32x96xbf16, #tpu.memory_space<vmem>>, %arg6: memref<1x32x32xbf16, #tpu.memory_space<vmem>>, %arg7: memref<1x1x32xf32, #tpu.memory_space<vmem>>, %arg8: memref<1x1x32xf32, #tpu.memory_space<vmem>>, %arg9: memref<1x1x32xf32, #tpu.memory_space<vmem>>, %arg10: memref<1x32x128xbf16, #tpu.memory_space<vmem>>, %arg11: memref<1x1x128xf32, #tpu.memory_space<vmem>>, %arg12: memref<1x128x32xbf16, #tpu.memory_space<vmem>>, %arg13: memref<1x1x32xf32, #tpu.memory_space<vmem>>, %arg14: memref<1x1x32xf32, #tpu.memory_space<vmem>>, %arg15: memref<1x1x32xf32, #tpu.memory_space<vmem>>, %arg16: memref<2x8x32xf32, #tpu.memory_space<vmem>>) attributes {dimension_semantics = [#tpu.dimension_semantics<parallel>, #tpu.dimension_semantics<arbitrary>], iteration_bounds = array<i64: 1, 2>, scalar_prefetch = 0 : i64, scratch_operands = 0 : i64, tpu.core_type = #tpu.core_type<tc>, window_params = [{transform_indices = @transform_0, window_bounds = array<i64: 2, 8, 32>}, {transform_indices = @transform_1, window_bounds = array<i64: 2, 8, 32>}, {transform_indices = @transform_2, window_bounds = array<i64: 2, 8, 32>}, {transform_indices = @transform_3, window_bounds = array<i64: 1, 32, 96>}, {transform_indices = @transform_4, window_bounds = array<i64: 1, 32, 32>}, {transform_indices = @transform_5, window_bounds = array<i64: 1, 1, 32>}, {transform_indices = @transform_6, window_bounds = array<i64: 1, 1, 32>}, {transform_indices = @transform_7, window_bounds = array<i64: 1, 1, 32>}, {transform_indices = @transform_8, window_bounds = array<i64: 1, 32, 128>}, {transform_indices = @transform_9, window_bounds = array<i64: 1, 1, 128>}, {transform_indices = @transform_10, window_bounds = array<i64: 1, 128, 32>}, {transform_indices = @transform_11, window_bounds = array<i64: 1, 1, 32>}, {transform_indices = @transform_12, window_bounds = array<i64: 1, 1, 32>}, {transform_indices = @transform_13, window_bounds = array<i64: 1, 1, 32>}, {transform_indices = @transform_14, window_bounds = array<i64: 2, 8, 32>}]} {
    %c0_i32 = arith.constant 0 : i32
    %0 = arith.cmpi eq, %arg1, %c0_i32 : i32
    %1 = arith.extui %0 : i1 to i32
    %c0_i32_0 = arith.constant 0 : i32
    %2 = arith.cmpi ne, %1, %c0_i32_0 : i32
    scf.if %2 {
      %c0_57 = arith.constant 0 : index
      %c0_58 = arith.constant 0 : index
      %c0_59 = arith.constant 0 : index
      %114 = vector.load %arg2[%c0_57, %c0_58, %c0_59] : memref<2x8x32xf32, #tpu.memory_space<vmem>>, vector<2x8x32xf32>
      %c0_60 = arith.constant 0 : index
      %c0_61 = arith.constant 0 : index
      %c0_62 = arith.constant 0 : index
      %115 = vector.load %arg3[%c0_60, %c0_61, %c0_62] : memref<2x8x32xf32, #tpu.memory_space<vmem>>, vector<2x8x32xf32>
      %116 = arith.addf %114, %115 : vector<2x8x32xf32>
      %c0_63 = arith.constant 0 : index
      %c0_64 = arith.constant 0 : index
      %c0_65 = arith.constant 0 : index
      %117 = vector.load %arg4[%c0_63, %c0_64, %c0_65] : memref<2x8x32xf32, #tpu.memory_space<vmem>>, vector<2x8x32xf32>
      %118 = arith.addf %116, %117 : vector<2x8x32xf32>
      %c0_66 = arith.constant 0 : index
      %c0_67 = arith.constant 0 : index
      %c0_68 = arith.constant 0 : index
      %119 = vector.load %arg16[%c0_66, %c0_67, %c0_68] : memref<2x8x32xf32, #tpu.memory_space<vmem>>, vector<2x8x32xf32>
      tpu.vector_store %arg16[%c0_66, %c0_67, %c0_68], %118 {strides = array<i32>} : memref<2x8x32xf32, #tpu.memory_space<vmem>>, vector<2x8x32xf32>,
    } else {
    }
    %c0 = arith.constant 0 : index
    %c0_1 = arith.constant 0 : index
    %c0_2 = arith.constant 0 : index
    %3 = vector.load %arg16[%c0, %c0_1, %c0_2] : memref<2x8x32xf32, #tpu.memory_space<vmem>>, vector<2x8x32xf32>
    %4 = vector.shape_cast %3 : vector<2x8x32xf32> to vector<16x32xf32>
    %5 = arith.truncf %4 : vector<16x32xf32> to vector<16x32xbf16>
    %c0_3 = arith.constant 0 : index
    %c0_4 = arith.constant 0 : index
    %c0_5 = arith.constant 0 : index
    %6 = vector.load %arg5[%c0_3, %c0_4, %c0_5] : memref<1x32x96xbf16, #tpu.memory_space<vmem>>, vector<1x32x96xbf16>
    %7 = vector.shape_cast %6 : vector<1x32x96xbf16> to vector<32x96xbf16>
    %cst = arith.constant dense<0.000000e+00> : vector<16x96xf32>
    %8 = tpu.matmul %5, %7, %cst {dimension_numbers = #tpu.dot_dimension_numbers<[1], [0], [0], [1], [0, 0, 1, 1], [], []>} : vector<16x32xbf16>, vector<32x96xbf16>, vector<16x96xf32> -> vector<16x96xf32>
    %9 = vector.shape_cast %8 : vector<16x96xf32> to vector<2x8x12x8xf32>
    %10 = tpu.transpose %9, [0, 2, 1, 3] : vector<2x8x12x8xf32> -> vector<2x12x8x8xf32>
    %11 = vector.extract_strided_slice %10 {offsets = [0, 0, 0, 0], sizes = [2, 4, 8, 8], strides = [1, 1, 1, 1]} : vector<2x12x8x8xf32> to vector<2x4x8x8xf32>
    %12 = vector.shape_cast %11 : vector<2x4x8x8xf32> to vector<8x8x8xf32>
    %13 = vector.extract_strided_slice %10 {offsets = [0, 4, 0, 0], sizes = [2, 4, 8, 8], strides = [1, 1, 1, 1]} : vector<2x12x8x8xf32> to vector<2x4x8x8xf32>
    %14 = vector.shape_cast %13 : vector<2x4x8x8xf32> to vector<8x8x8xf32>
    %15 = vector.extract_strided_slice %10 {offsets = [0, 8, 0, 0], sizes = [2, 4, 8, 8], strides = [1, 1, 1, 1]} : vector<2x12x8x8xf32> to vector<2x4x8x8xf32>
    %16 = vector.shape_cast %15 : vector<2x4x8x8xf32> to vector<8x8x8xf32>
    %17 = arith.truncf %12 : vector<8x8x8xf32> to vector<8x8x8xbf16>
    %18 = arith.truncf %14 : vector<8x8x8xf32> to vector<8x8x8xbf16>
    "tpu.trace_start"() <{level = 10 : i32, message = "bqd,bkd->bqk"}> : () -> ()
    %cst_6 = arith.constant dense<0.000000e+00> : vector<8x8x8xf32>
    %19 = tpu.matmul %17, %18, %cst_6 {dimension_numbers = #tpu.dot_dimension_numbers<[2], [2], [1], [1], [0, 0, 0, 1, 1, 1], [0], [0]>} : vector<8x8x8xbf16>, vector<8x8x8xbf16>, vector<8x8x8xf32> -> vector<8x8x8xf32>
    "tpu.trace_stop"() : () -> ()
    %cst_7 = arith.constant dense<0xFF800000> : vector<8x8xf32>
    %20 = vector.multi_reduction <maximumf>, %19, %cst_7 [2] : vector<8x8x8xf32> to vector<8x8xf32>
    %21 = vector.shape_cast %20 : vector<8x8xf32> to vector<8x8x1xf32>
    %22 = vector.broadcast %21 : vector<8x8x1xf32> to vector<8x8x8xf32>
    %23 = arith.subf %19, %22 : vector<8x8x8xf32>
    %24 = math.exp %23 : vector<8x8x8xf32>
    %cst_8 = arith.constant dense<0.000000e+00> : vector<8x8xf32>
    %25 = vector.multi_reduction <add>, %24, %cst_8 [2] : vector<8x8x8xf32> to vector<8x8xf32>
    %26 = vector.shape_cast %25 : vector<8x8xf32> to vector<8x8x1xf32>
    %27 = tpu.reciprocal %26 {approx = true} : vector<8x8x1xf32> -> vector<8x8x1xf32>
    %28 = vector.broadcast %27 : vector<8x8x1xf32> to vector<8x8x8xf32>
    %29 = arith.mulf %24, %28 : vector<8x8x8xf32>
    %30 = arith.truncf %29 : vector<8x8x8xf32> to vector<8x8x8xbf16>
    %31 = arith.truncf %16 : vector<8x8x8xf32> to vector<8x8x8xbf16>
    "tpu.trace_start"() <{level = 10 : i32, message = "bqk,bkd->bqd"}> : () -> ()
    %cst_9 = arith.constant dense<0.000000e+00> : vector<8x8x8xf32>
    %32 = tpu.matmul %30, %31, %cst_9 {dimension_numbers = #tpu.dot_dimension_numbers<[2], [1], [1], [2], [0, 0, 0, 1, 1, 2], [0], [0]>} : vector<8x8x8xbf16>, vector<8x8x8xbf16>, vector<8x8x8xf32> -> vector<8x8x8xf32>
    "tpu.trace_stop"() : () -> ()
    %33 = vector.shape_cast %32 : vector<8x8x8xf32> to vector<2x4x8x8xf32>
    %34 = tpu.transpose %33, [0, 2, 1, 3] : vector<2x4x8x8xf32> -> vector<2x8x4x8xf32>
    %35 = vector.shape_cast %34 : vector<2x8x4x8xf32> to vector<16x32xf32>
    %36 = arith.truncf %35 : vector<16x32xf32> to vector<16x32xbf16>
    %c0_10 = arith.constant 0 : index
    %c0_11 = arith.constant 0 : index
    %c0_12 = arith.constant 0 : index
    %37 = vector.load %arg6[%c0_10, %c0_11, %c0_12] : memref<1x32x32xbf16, #tpu.memory_space<vmem>>, vector<1x32x32xbf16>
    %38 = vector.shape_cast %37 : vector<1x32x32xbf16> to vector<32x32xbf16>
    %cst_13 = arith.constant dense<0.000000e+00> : vector<16x32xf32>
    %39 = tpu.matmul %36, %38, %cst_13 {dimension_numbers = #tpu.dot_dimension_numbers<[1], [0], [0], [1], [0, 0, 1, 1], [], []>} : vector<16x32xbf16>, vector<32x32xbf16>, vector<16x32xf32> -> vector<16x32xf32>
    %c0_14 = arith.constant 0 : index
    %c0_15 = arith.constant 0 : index
    %c0_16 = arith.constant 0 : index
    %40 = vector.load %arg7[%c0_14, %c0_15, %c0_16] : memref<1x1x32xf32, #tpu.memory_space<vmem>>, vector<1x1x32xf32>
    %41 = vector.shape_cast %40 : vector<1x1x32xf32> to vector<1x32xf32>
    %42 = vector.broadcast %41 : vector<1x32xf32> to vector<16x32xf32>
    %43 = arith.addf %39, %42 : vector<16x32xf32>
    %44 = arith.addf %43, %4 : vector<16x32xf32>
    %c0_17 = arith.constant 0 : index
    %c0_18 = arith.constant 0 : index
    %c0_19 = arith.constant 0 : index
    %45 = vector.load %arg8[%c0_17, %c0_18, %c0_19] : memref<1x1x32xf32, #tpu.memory_space<vmem>>, vector<1x1x32xf32>
    %46 = vector.shape_cast %45 : vector<1x1x32xf32> to vector<1x32xf32>
    %c0_20 = arith.constant 0 : index
    %c0_21 = arith.constant 0 : index
    %c0_22 = arith.constant 0 : index
    %47 = vector.load %arg9[%c0_20, %c0_21, %c0_22] : memref<1x1x32xf32, #tpu.memory_space<vmem>>, vector<1x1x32xf32>
    %48 = vector.shape_cast %47 : vector<1x1x32xf32> to vector<1x32xf32>
    %cst_23 = arith.constant dense<0.000000e+00> : vector<16xf32>
    %49 = vector.multi_reduction <add>, %44, %cst_23 [1] : vector<16x32xf32> to vector<16xf32>
    %50 = vector.shape_cast %49 : vector<16xf32> to vector<16x1xf32>
    %cst_24 = arith.constant 3.200000e+01 : f32
    %51 = vector.broadcast %cst_24 : f32 to vector<16x1xf32>
    %52 = arith.divf %50, %51 : vector<16x1xf32>
    %53 = vector.broadcast %52 : vector<16x1xf32> to vector<16x32xf32>
    %54 = arith.subf %44, %53 : vector<16x32xf32>
    %55 = arith.mulf %54, %54 : vector<16x32xf32>
    %cst_25 = arith.constant dense<0.000000e+00> : vector<16xf32>
    %56 = vector.multi_reduction <add>, %55, %cst_25 [1] : vector<16x32xf32> to vector<16xf32>
    %57 = vector.shape_cast %56 : vector<16xf32> to vector<16x1xf32>
    %cst_26 = arith.constant 3.200000e+01 : f32
    %58 = vector.broadcast %cst_26 : f32 to vector<16x1xf32>
    %59 = arith.divf %57, %58 : vector<16x1xf32>
    %cst_27 = arith.constant 9.99999974E-6 : f32
    %60 = vector.broadcast %cst_27 : f32 to vector<16x1xf32>
    %61 = arith.addf %59, %60 : vector<16x1xf32>
    %62 = math.rsqrt %61 : vector<16x1xf32>
    %63 = vector.broadcast %62 : vector<16x1xf32> to vector<16x32xf32>
    %64 = arith.mulf %54, %63 : vector<16x32xf32>
    %65 = vector.broadcast %46 : vector<1x32xf32> to vector<16x32xf32>
    %66 = arith.mulf %64, %65 : vector<16x32xf32>
    %67 = vector.broadcast %48 : vector<1x32xf32> to vector<16x32xf32>
    %68 = arith.addf %66, %67 : vector<16x32xf32>
    %69 = arith.truncf %68 : vector<16x32xf32> to vector<16x32xbf16>
    %c0_28 = arith.constant 0 : index
    %c0_29 = arith.constant 0 : index
    %c0_30 = arith.constant 0 : index
    %70 = vector.load %arg10[%c0_28, %c0_29, %c0_30] : memref<1x32x128xbf16, #tpu.memory_space<vmem>>, vector<1x32x128xbf16>
    %71 = vector.shape_cast %70 : vector<1x32x128xbf16> to vector<32x128xbf16>
    %cst_31 = arith.constant dense<0.000000e+00> : vector<16x128xf32>
    %72 = tpu.matmul %69, %71, %cst_31 {dimension_numbers = #tpu.dot_dimension_numbers<[1], [0], [0], [1], [0, 0, 1, 1], [], []>} : vector<16x32xbf16>, vector<32x128xbf16>, vector<16x128xf32> -> vector<16x128xf32>
    %c0_32 = arith.constant 0 : index
    %c0_33 = arith.constant 0 : index
    %c0_34 = arith.constant 0 : index
    %73 = vector.load %arg11[%c0_32, %c0_33, %c0_34] : memref<1x1x128xf32, #tpu.memory_space<vmem>>, vector<1x1x128xf32>
    %74 = vector.shape_cast %73 : vector<1x1x128xf32> to vector<1x128xf32>
    %75 = vector.broadcast %74 : vector<1x128xf32> to vector<16x128xf32>
    %76 = arith.addf %72, %75 : vector<16x128xf32>
    %cst_35 = arith.constant 0.000000e+00 : f32
    %77 = vector.broadcast %cst_35 : f32 to vector<16x128xf32>
    %78 = arith.maximumf %76, %77 : vector<16x128xf32>
    %79 = arith.truncf %78 : vector<16x128xf32> to vector<16x128xbf16>
    %c0_36 = arith.constant 0 : index
    %c0_37 = arith.constant 0 : index
    %c0_38 = arith.constant 0 : index
    %80 = vector.load %arg12[%c0_36, %c0_37, %c0_38] : memref<1x128x32xbf16, #tpu.memory_space<vmem>>, vector<1x128x32xbf16>
    %81 = vector.shape_cast %80 : vector<1x128x32xbf16> to vector<128x32xbf16>
    %cst_39 = arith.constant dense<0.000000e+00> : vector<16x32xf32>
    %82 = tpu.matmul %79, %81, %cst_39 {dimension_numbers = #tpu.dot_dimension_numbers<[1], [0], [0], [1], [0, 0, 1, 1], [], []>} : vector<16x128xbf16>, vector<128x32xbf16>, vector<16x32xf32> -> vector<16x32xf32>
    %c0_40 = arith.constant 0 : index
    %c0_41 = arith.constant 0 : index
    %c0_42 = arith.constant 0 : index
    %83 = vector.load %arg13[%c0_40, %c0_41, %c0_42] : memref<1x1x32xf32, #tpu.memory_space<vmem>>, vector<1x1x32xf32>
    %84 = vector.shape_cast %83 : vector<1x1x32xf32> to vector<1x32xf32>
    %85 = vector.broadcast %84 : vector<1x32xf32> to vector<16x32xf32>
    %86 = arith.addf %82, %85 : vector<16x32xf32>
    %87 = arith.addf %86, %68 : vector<16x32xf32>
    %c0_43 = arith.constant 0 : index
    %c0_44 = arith.constant 0 : index
    %c0_45 = arith.constant 0 : index
    %88 = vector.load %arg14[%c0_43, %c0_44, %c0_45] : memref<1x1x32xf32, #tpu.memory_space<vmem>>, vector<1x1x32xf32>
    %89 = vector.shape_cast %88 : vector<1x1x32xf32> to vector<1x32xf32>
    %c0_46 = arith.constant 0 : index
    %c0_47 = arith.constant 0 : index
    %c0_48 = arith.constant 0 : index
    %90 = vector.load %arg15[%c0_46, %c0_47, %c0_48] : memref<1x1x32xf32, #tpu.memory_space<vmem>>, vector<1x1x32xf32>
    %91 = vector.shape_cast %90 : vector<1x1x32xf32> to vector<1x32xf32>
    %cst_49 = arith.constant dense<0.000000e+00> : vector<16xf32>
    %92 = vector.multi_reduction <add>, %87, %cst_49 [1] : vector<16x32xf32> to vector<16xf32>
    %93 = vector.shape_cast %92 : vector<16xf32> to vector<16x1xf32>
    %cst_50 = arith.constant 3.200000e+01 : f32
    %94 = vector.broadcast %cst_50 : f32 to vector<16x1xf32>
    %95 = arith.divf %93, %94 : vector<16x1xf32>
    %96 = vector.broadcast %95 : vector<16x1xf32> to vector<16x32xf32>
    %97 = arith.subf %87, %96 : vector<16x32xf32>
    %98 = arith.mulf %97, %97 : vector<16x32xf32>
    %cst_51 = arith.constant dense<0.000000e+00> : vector<16xf32>
    %99 = vector.multi_reduction <add>, %98, %cst_51 [1] : vector<16x32xf32> to vector<16xf32>
    %100 = vector.shape_cast %99 : vector<16xf32> to vector<16x1xf32>
    %cst_52 = arith.constant 3.200000e+01 : f32
    %101 = vector.broadcast %cst_52 : f32 to vector<16x1xf32>
    %102 = arith.divf %100, %101 : vector<16x1xf32>
    %cst_53 = arith.constant 9.99999974E-6 : f32
    %103 = vector.broadcast %cst_53 : f32 to vector<16x1xf32>
    %104 = arith.addf %102, %103 : vector<16x1xf32>
    %105 = math.rsqrt %104 : vector<16x1xf32>
    %106 = vector.broadcast %105 : vector<16x1xf32> to vector<16x32xf32>
    %107 = arith.mulf %97, %106 : vector<16x32xf32>
    %108 = vector.broadcast %89 : vector<1x32xf32> to vector<16x32xf32>
    %109 = arith.mulf %107, %108 : vector<16x32xf32>
    %110 = vector.broadcast %91 : vector<1x32xf32> to vector<16x32xf32>
    %111 = arith.addf %109, %110 : vector<16x32xf32>
    %112 = vector.shape_cast %111 : vector<16x32xf32> to vector<2x8x32xf32>
    %c0_54 = arith.constant 0 : index
    %c0_55 = arith.constant 0 : index
    %c0_56 = arith.constant 0 : index
    %113 = vector.load %arg16[%c0_54, %c0_55, %c0_56] : memref<2x8x32xf32, #tpu.memory_space<vmem>>, vector<2x8x32xf32>
    tpu.vector_store %arg16[%c0_54, %c0_55, %c0_56], %112 {strides = array<i32>} : memref<2x8x32xf32, #tpu.memory_space<vmem>>, vector<2x8x32xf32>,
    return
  }
  func.func @transform_0(%arg0: i32, %arg1: i32) -> (i32, i32, i32) {
    %c0_i32 = arith.constant 0 : i32
    %c0_i32_0 = arith.constant 0 : i32
    %c0_i32_1 = arith.constant 0 : i32
    return %arg0, %c0_i32, %c0_i32_0 : i32, i32, i32
  }
  func.func @transform_1(%arg0: i32, %arg1: i32) -> (i32, i32, i32) {
    %c0_i32 = arith.constant 0 : i32
    %c0_i32_0 = arith.constant 0 : i32
    %c0_i32_1 = arith.constant 0 : i32
    return %arg0, %c0_i32, %c0_i32_0 : i32, i32, i32
  }
  func.func @transform_2(%arg0: i32, %arg1: i32) -> (i32, i32, i32) {
    %c0_i32 = arith.constant 0 : i32
    %c0_i32_0 = arith.constant 0 : i32
    %c0_i32_1 = arith.constant 0 : i32
    return %arg0, %c0_i32, %c0_i32_0 : i32, i32, i32
  }
  func.func @transform_3(%arg0: i32, %arg1: i32) -> (i32, i32, i32) {
    %c0_i32 = arith.constant 0 : i32
    %c0_i32_0 = arith.constant 0 : i32
    %c0_i32_1 = arith.constant 0 : i32
    return %arg1, %c0_i32, %c0_i32_0 : i32, i32, i32
  }
  func.func @transform_4(%arg0: i32, %arg1: i32) -> (i32, i32, i32) {
    %c0_i32 = arith.constant 0 : i32
    %c0_i32_0 = arith.constant 0 : i32
    %c0_i32_1 = arith.constant 0 : i32
    return %arg1, %c0_i32, %c0_i32_0 : i32, i32, i32
  }
  func.func @transform_5(%arg0: i32, %arg1: i32) -> (i32, i32, i32) {
    %c0_i32 = arith.constant 0 : i32
    %c0_i32_0 = arith.constant 0 : i32
    %c0_i32_1 = arith.constant 0 : i32
    return %arg1, %c0_i32, %c0_i32_0 : i32, i32, i32
  }
  func.func @transform_6(%arg0: i32, %arg1: i32) -> (i32, i32, i32) {
    %c0_i32 = arith.constant 0 : i32
    %c0_i32_0 = arith.constant 0 : i32
    %c0_i32_1 = arith.constant 0 : i32
    return %arg1, %c0_i32, %c0_i32_0 : i32, i32, i32
  }
  func.func @transform_7(%arg0: i32, %arg1: i32) -> (i32, i32, i32) {
    %c0_i32 = arith.constant 0 : i32
    %c0_i32_0 = arith.constant 0 : i32
    %c0_i32_1 = arith.constant 0 : i32
    return %arg1, %c0_i32, %c0_i32_0 : i32, i32, i32
  }
  func.func @transform_8(%arg0: i32, %arg1: i32) -> (i32, i32, i32) {
    %c0_i32 = arith.constant 0 : i32
    %c0_i32_0 = arith.constant 0 : i32
    %c0_i32_1 = arith.constant 0 : i32
    return %arg1, %c0_i32, %c0_i32_0 : i32, i32, i32
  }
  func.func @transform_9(%arg0: i32, %arg1: i32) -> (i32, i32, i32) {
    %c0_i32 = arith.constant 0 : i32
    %c0_i32_0 = arith.constant 0 : i32
    %c0_i32_1 = arith.constant 0 : i32
    return %arg1, %c0_i32, %c0_i32_0 : i32, i32, i32
  }
  func.func @transform_10(%arg0: i32, %arg1: i32) -> (i32, i32, i32) {
    %c0_i32 = arith.constant 0 : i32
    %c0_i32_0 = arith.constant 0 : i32
    %c0_i32_1 = arith.constant 0 : i32
    return %arg1, %c0_i32, %c0_i32_0 : i32, i32, i32
  }
  func.func @transform_11(%arg0: i32, %arg1: i32) -> (i32, i32, i32) {
    %c0_i32 = arith.constant 0 : i32
    %c0_i32_0 = arith.constant 0 : i32
    %c0_i32_1 = arith.constant 0 : i32
    return %arg1, %c0_i32, %c0_i32_0 : i32, i32, i32
  }
  func.func @transform_12(%arg0: i32, %arg1: i32) -> (i32, i32, i32) {
    %c0_i32 = arith.constant 0 : i32
    %c0_i32_0 = arith.constant 0 : i32
    %c0_i32_1 = arith.constant 0 : i32
    return %arg1, %c0_i32, %c0_i32_0 : i32, i32, i32
  }
  func.func @transform_13(%arg0: i32, %arg1: i32) -> (i32, i32, i32) {
    %c0_i32 = arith.constant 0 : i32
    %c0_i32_0 = arith.constant 0 : i32
    %c0_i32_1 = arith.constant 0 : i32
    return %arg1, %c0_i32, %c0_i32_0 : i32, i32, i32
  }
  func.func @transform_14(%arg0: i32, %arg1: i32) -> (i32, i32, i32) {
    %c0_i32 = arith.constant 0 : i32
    %c0_i32_0 = arith.constant 0 : i32
    %c0_i32_1 = arith.constant 0 : i32
    return %arg0, %c0_i32, %c0_i32_0 : i32, i32, i32
  }
}

</mosaic_0001>

<llo_original>
// kernel: tpu_custom_call.1
$region0: #{tpu_custom_call.1}
  #allocation0 [shape = 'u32[]', space=smem, size = 0x4, offset = 0x4, fixed_abs, tag = 'smem constant byte address 0x4 - core index']
  #allocation1 [shape = 'u32[72,128]{1,0:T(1,128)}', space=vmem, size = 0x9000, scoped, tag = 'internal scratch']
  %s0 = inlined_call_operand.vmem [shape: f32[2,8,32], index: 0, kind: input, shape index: {}]
  %s1 = inlined_call_operand.vmem [shape: f32[2,8,32], index: 1, kind: input, shape index: {}]
  %s2 = inlined_call_operand.vmem [shape: f32[2,8,32], index: 2, kind: input, shape index: {}]
  %s3 = inlined_call_operand.vmem [shape: bf16[2,32,96], index: 3, kind: input, shape index: {}]
  %s4 = inlined_call_operand.vmem [shape: bf16[2,32,32], index: 4, kind: input, shape index: {}]
  %s5 = inlined_call_operand.vmem [shape: f32[2,1,32], index: 5, kind: input, shape index: {}]
  %s6 = inlined_call_operand.vmem [shape: f32[2,1,32], index: 6, kind: input, shape index: {}]
  %s7 = inlined_call_operand.vmem [shape: f32[2,1,32], index: 7, kind: input, shape index: {}]
  %s8 = inlined_call_operand.vmem [shape: bf16[2,32,128], index: 8, kind: input, shape index: {}]
  %s9 = inlined_call_operand.vmem [shape: f32[2,1,128], index: 9, kind: input, shape index: {}]
  %s10 = inlined_call_operand.vmem [shape: bf16[2,128,32], index: 10, kind: input, shape index: {}]
  %s11 = inlined_call_operand.vmem [shape: f32[2,1,32], index: 11, kind: input, shape index: {}]
  %s12 = inlined_call_operand.vmem [shape: f32[2,1,32], index: 12, kind: input, shape index: {}]
  %s13 = inlined_call_operand.vmem [shape: f32[2,1,32], index: 13, kind: input, shape index: {}]
  %s14 = inlined_call_operand.hbm [shape: f32[2,8,32], index: 14, kind: output, shape index: {}]
  %s15 = sld [smem:[#allocation0]]
  $region93: #{tpu_custom_call.1} parent=0
    _
  %s17 = ssub.s32 1, %s15
  %s18 = scalar_select 0, %s17, %s15
  $region1: #{tpu_custom_call.1} parent=0
    #allocation2 [shape = 'u8[8192]{0}', space=vmem, size = 0x2000, scoped, tag = 'output window, operand 0, single buffered']
    #allocation3 [shape = 's32[2]{0}', space=sflag, size = 0x8, scoped, tag = 'scoped memory for tpu_custom_call.1']
    %19 = vsyncpa [#allocation3], 0
    loop: start=0, step=1, limit=4
    $region2: #{tpu_custom_call.1} parent=1 // loop_pre_header
      _
    $region3: #{tpu_custom_call.1} parent=1 // loop_header
      %s21 = sphi 0, %s25
      %p22 = scmp.ge.s32.totalorder %s21, 4
      %s28 = sphi 0, %s40
      %s29 = sphi 0, %s36
      %s30 = sphi 0, %s28
      %s31 = sphi 0, %s29
      %s32 = sphi 0, %s30
      %s33 = sphi 0, %s31
      %s43 = sphi 0, %s45
      %s46 = sphi 0, %s43
      %s47 = sphi 0, %s46
      %s63 = sphi 0, %s47
      %s69 = sphi 0, %s71
      %s72 = sphi 0, %s69
      %s73 = sphi 0, %s72
      %s89 = sphi 0, %s73
      %s95 = sphi 0, %s97
      %s98 = sphi 0, %s95
      %s99 = sphi 0, %s98
      %s115 = sphi 0, %s99
      %s121 = sphi 0, %s123
      %s124 = sphi 0, %s121
      %s125 = sphi 0, %s124
      %s141 = sphi 0, %s125
      %s147 = sphi 0, %s149
      %s150 = sphi 0, %s147
      %s151 = sphi 0, %s150
      %s167 = sphi 0, %s151
      %s173 = sphi 0, %s175
      %s176 = sphi 0, %s173
      %s177 = sphi 0, %s176
      %s193 = sphi 0, %s177
      %s199 = sphi 0, %s201
      %s202 = sphi 0, %s199
      %s203 = sphi 0, %s202
      %s219 = sphi 0, %s203
      %s225 = sphi 0, %s227
      %s228 = sphi 0, %s225
      %s229 = sphi 0, %s228
      %s245 = sphi 0, %s229
      %s251 = sphi 0, %s253
      %s254 = sphi 0, %s251
      %s255 = sphi 0, %s254
      %s271 = sphi 0, %s255
      %s277 = sphi 0, %s279
      %s280 = sphi 0, %s277
      %s281 = sphi 0, %s280
      %s297 = sphi 0, %s281
      %s303 = sphi 0, %s305
      %s306 = sphi 0, %s303
      %s307 = sphi 0, %s306
      %s323 = sphi 0, %s307
      %s329 = sphi 0, %s331
      %s332 = sphi 0, %s329
      %s333 = sphi 0, %s332
      %s349 = sphi 0, %s333
      %s355 = sphi 0, %s357
      %s358 = sphi 0, %s355
      %s359 = sphi 0, %s358
      %s375 = sphi 0, %s359
      %s381 = sphi 0, %s383
      %s384 = sphi 0, %s381
      %s385 = sphi 0, %s384
      %s401 = sphi 0, %s385
      %s407 = sphi 0, %s409
      %s410 = sphi 0, %s407
      %s411 = sphi 0, %s410
      %s427 = sphi 0, %s411
    $region4: #{tpu_custom_call.1} parent=1 // loop_header_branch
      %24 = sbr.rel (%p22) target = $region8
    $region5: #{tpu_custom_call.1} parent=1 // loop_body
      %s26 = ssub.s32 %s21, 1
      %s27 = ssub.s32 %s21, 2
      %s34 = sadd.s32 1, %s29
      %p35 = scmp.ge.s32.totalorder %s34, 2
      %s36 = scalar_select %p35, 0, %s34
      %s37 = sadd.s32 1, %s28
      %s38 = scalar_select %p35, %s37, %s28
      %p39 = scmp.ge.s32.totalorder %s38, 1
      %s40 = scalar_select %p39, 0, %s38
      %s41 = ssub.s32 %s28, %s40
      %p42 = scmp.eq.s32.totalorder %s41, 0
      %s44 = sadd.s32 %s43, 1
      %s45 = scalar_select %p42, %s43, %s44
      %p48 = pneg %p42
      %p49 = scmp.eq.s32.totalorder %s21, 1
      %p50 = por %p48, %p49
      %p51 = scmp.ne.s32.totalorder %s43, %s46
      %p52 = scmp.eq.s32.totalorder %s21, 0
      %p53 = por %p51, %p52
      %p54 = scmp.ne.s32.totalorder %s43, %s46
      %p55 = scmp.eq.s32.totalorder %s26, 1
      %p56 = por %p54, %p55
      %p57 = scmp.ne.s32.totalorder %s46, %s47
      %p58 = scmp.eq.s32.totalorder %s26, 0
      %p59 = por %p57, %p58
      %p60 = scmp.ne.s32.totalorder %s46, %s47
      %p61 = scmp.eq.s32.totalorder %s27, 1
      %p62 = por %p60, %p61
      %p64 = scmp.ne.s32.totalorder %s47, %s63
      %p65 = scmp.eq.s32.totalorder %s27, 0
      %p66 = por %p64, %p65
      %s67 = ssub.s32 %s28, %s40
      %p68 = scmp.eq.s32.totalorder %s67, 0
      %s70 = sadd.s32 %s69, 1
      %s71 = scalar_select %p68, %s69, %s70
      %p74 = pneg %p68
      %p75 = scmp.eq.s32.totalorder %s21, 1
      %p76 = por %p74, %p75
      %p77 = scmp.ne.s32.totalorder %s69, %s72
      %p78 = scmp.eq.s32.totalorder %s21, 0
      %p79 = por %p77, %p78
      %p80 = scmp.ne.s32.totalorder %s69, %s72
      %p81 = scmp.eq.s32.totalorder %s26, 1
      %p82 = por %p80, %p81
      %p83 = scmp.ne.s32.totalorder %s72, %s73
      %p84 = scmp.eq.s32.totalorder %s26, 0
      %p85 = por %p83, %p84
      %p86 = scmp.ne.s32.totalorder %s72, %s73
      %p87 = scmp.eq.s32.totalorder %s27, 1
      %p88 = por %p86, %p87
      %p90 = scmp.ne.s32.totalorder %s73, %s89
      %p91 = scmp.eq.s32.totalorder %s27, 0
      %p92 = por %p90, %p91
      %s93 = ssub.s32 %s28, %s40
      %p94 = scmp.eq.s32.totalorder %s93, 0
      %s96 = sadd.s32 %s95, 1
      %s97 = scalar_select %p94, %s95, %s96
      %p100 = pneg %p94
      %p101 = scmp.eq.s32.totalorder %s21, 1
      %p102 = por %p100, %p101
      %p103 = scmp.ne.s32.totalorder %s95, %s98
      %p104 = scmp.eq.s32.totalorder %s21, 0
      %p105 = por %p103, %p104
      %p106 = scmp.ne.s32.totalorder %s95, %s98
      %p107 = scmp.eq.s32.totalorder %s26, 1
      %p108 = por %p106, %p107
      %p109 = scmp.ne.s32.totalorder %s98, %s99
      %p110 = scmp.eq.s32.totalorder %s26, 0
      %p111 = por %p109, %p110
      %p112 = scmp.ne.s32.totalorder %s98, %s99
      %p113 = scmp.eq.s32.totalorder %s27, 1
      %p114 = por %p112, %p113
      %p116 = scmp.ne.s32.totalorder %s99, %s115
      %p117 = scmp.eq.s32.totalorder %s27, 0
      %p118 = por %p116, %p117
      %s119 = ssub.s32 %s29, %s36
      %p120 = scmp.eq.s32.totalorder %s119, 0
      %s122 = sadd.s32 %s121, 1
      %s123 = scalar_select %p120, %s121, %s122
      %p126 = pneg %p120
      %p127 = scmp.eq.s32.totalorder %s21, 1
      %p128 = por %p126, %p127
      %p129 = scmp.ne.s32.totalorder %s121, %s124
      %p130 = scmp.eq.s32.totalorder %s21, 0
      %p131 = por %p129, %p130
      %p132 = scmp.ne.s32.totalorder %s121, %s124
      %p133 = scmp.eq.s32.totalorder %s26, 1
      %p134 = por %p132, %p133
      %p135 = scmp.ne.s32.totalorder %s124, %s125
      %p136 = scmp.eq.s32.totalorder %s26, 0
      %p137 = por %p135, %p136
      %p138 = scmp.ne.s32.totalorder %s124, %s125
      %p139 = scmp.eq.s32.totalorder %s27, 1
      %p140 = por %p138, %p139
      %p142 = scmp.ne.s32.totalorder %s125, %s141
      %p143 = scmp.eq.s32.totalorder %s27, 0
      %p144 = por %p142, %p143
      %s145 = ssub.s32 %s29, %s36
      %p146 = scmp.eq.s32.totalorder %s145, 0
      %s148 = sadd.s32 %s147, 1
      %s149 = scalar_select %p146, %s147, %s148
      %p152 = pneg %p146
      %p153 = scmp.eq.s32.totalorder %s21, 1
      %p154 = por %p152, %p153
      %p155 = scmp.ne.s32.totalorder %s147, %s150
      %p156 = scmp.eq.s32.totalorder %s21, 0
      %p157 = por %p155, %p156
      %p158 = scmp.ne.s32.totalorder %s147, %s150
      %p159 = scmp.eq.s32.totalorder %s26, 1
      %p160 = por %p158, %p159
      %p161 = scmp.ne.s32.totalorder %s150, %s151
      %p162 = scmp.eq.s32.totalorder %s26, 0
      %p163 = por %p161, %p162
      %p164 = scmp.ne.s32.totalorder %s150, %s151
      %p165 = scmp.eq.s32.totalorder %s27, 1
      %p166 = por %p164, %p165
      %p168 = scmp.ne.s32.totalorder %s151, %s167
      %p169 = scmp.eq.s32.totalorder %s27, 0
      %p170 = por %p168, %p169
      %s171 = ssub.s32 %s29, %s36
      %p172 = scmp.eq.s32.totalorder %s171, 0
      %s174 = sadd.s32 %s173, 1
      %s175 = scalar_select %p172, %s173, %s174
      %p178 = pneg %p172
      %p179 = scmp.eq.s32.totalorder %s21, 1
      %p180 = por %p178, %p179
      %p181 = scmp.ne.s32.totalorder %s173, %s176
      %p182 = scmp.eq.s32.totalorder %s21, 0
      %p183 = por %p181, %p182
      %p184 = scmp.ne.s32.totalorder %s173, %s176
      %p185 = scmp.eq.s32.totalorder %s26, 1
      %p186 = por %p184, %p185
      %p187 = scmp.ne.s32.totalorder %s176, %s177
      %p188 = scmp.eq.s32.totalorder %s26, 0
      %p189 = por %p187, %p188
      %p190 = scmp.ne.s32.totalorder %s176, %s177
      %p191 = scmp.eq.s32.totalorder %s27, 1
      %p192 = por %p190, %p191
      %p194 = scmp.ne.s32.totalorder %s177, %s193
      %p195 = scmp.eq.s32.totalorder %s27, 0
      %p196 = por %p194, %p195
      %s197 = ssub.s32 %s29, %s36
      %p198 = scmp.eq.s32.totalorder %s197, 0
      %s200 = sadd.s32 %s199, 1
      %s201 = scalar_select %p198, %s199, %s200
      %p204 = pneg %p198
      %p205 = scmp.eq.s32.totalorder %s21, 1
      %p206 = por %p204, %p205
      %p207 = scmp.ne.s32.totalorder %s199, %s202
      %p208 = scmp.eq.s32.totalorder %s21, 0
      %p209 = por %p207, %p208
      %p210 = scmp.ne.s32.totalorder %s199, %s202
      %p211 = scmp.eq.s32.totalorder %s26, 1
      %p212 = por %p210, %p211
      %p213 = scmp.ne.s32.totalorder %s202, %s203
      %p214 = scmp.eq.s32.totalorder %s26, 0
      %p215 = por %p213, %p214
      %p216 = scmp.ne.s32.totalorder %s202, %s203
      %p217 = scmp.eq.s32.totalorder %s27, 1
      %p218 = por %p216, %p217
      %p220 = scmp.ne.s32.totalorder %s203, %s219
      %p221 = scmp.eq.s32.totalorder %s27, 0
      %p222 = por %p220, %p221
      %s223 = ssub.s32 %s29, %s36
      %p224 = scmp.eq.s32.totalorder %s223, 0
      %s226 = sadd.s32 %s225, 1
      %s227 = scalar_select %p224, %s225, %s226
      %p230 = pneg %p224
      %p231 = scmp.eq.s32.totalorder %s21, 1
      %p232 = por %p230, %p231
      %p233 = scmp.ne.s32.totalorder %s225, %s228
      %p234 = scmp.eq.s32.totalorder %s21, 0
      %p235 = por %p233, %p234
      %p236 = scmp.ne.s32.totalorder %s225, %s228
      %p237 = scmp.eq.s32.totalorder %s26, 1
      %p238 = por %p236, %p237
      %p239 = scmp.ne.s32.totalorder %s228, %s229
      %p240 = scmp.eq.s32.totalorder %s26, 0
      %p241 = por %p239, %p240
      %p242 = scmp.ne.s32.totalorder %s228, %s229
      %p243 = scmp.eq.s32.totalorder %s27, 1
      %p244 = por %p242, %p243
      %p246 = scmp.ne.s32.totalorder %s229, %s245
      %p247 = scmp.eq.s32.totalorder %s27, 0
      %p248 = por %p246, %p247
      %s249 = ssub.s32 %s29, %s36
      %p250 = scmp.eq.s32.totalorder %s249, 0
      %s252 = sadd.s32 %s251, 1
      %s253 = scalar_select %p250, %s251, %s252
      %p256 = pneg %p250
      %p257 = scmp.eq.s32.totalorder %s21, 1
      %p258 = por %p256, %p257
      %p259 = scmp.ne.s32.totalorder %s251, %s254
      %p260 = scmp.eq.s32.totalorder %s21, 0
      %p261 = por %p259, %p260
      %p262 = scmp.ne.s32.totalorder %s251, %s254
      %p263 = scmp.eq.s32.totalorder %s26, 1
      %p264 = por %p262, %p263
      %p265 = scmp.ne.s32.totalorder %s254, %s255
      %p266 = scmp.eq.s32.totalorder %s26, 0
      %p267 = por %p265, %p266
      %p268 = scmp.ne.s32.totalorder %s254, %s255
      %p269 = scmp.eq.s32.totalorder %s27, 1
      %p270 = por %p268, %p269
      %p272 = scmp.ne.s32.totalorder %s255, %s271
      %p273 = scmp.eq.s32.totalorder %s27, 0
      %p274 = por %p272, %p273
      %s275 = ssub.s32 %s29, %s36
      %p276 = scmp.eq.s32.totalorder %s275, 0
      %s278 = sadd.s32 %s277, 1
      %s279 = scalar_select %p276, %s277, %s278
      %p282 = pneg %p276
      %p283 = scmp.eq.s32.totalorder %s21, 1
      %p284 = por %p282, %p283
      %p285 = scmp.ne.s32.totalorder %s277, %s280
      %p286 = scmp.eq.s32.totalorder %s21, 0
      %p287 = por %p285, %p286
      %p288 = scmp.ne.s32.totalorder %s277, %s280
      %p289 = scmp.eq.s32.totalorder %s26, 1
      %p290 = por %p288, %p289
      %p291 = scmp.ne.s32.totalorder %s280, %s281
      %p292 = scmp.eq.s32.totalorder %s26, 0
      %p293 = por %p291, %p292
      %p294 = scmp.ne.s32.totalorder %s280, %s281
      %p295 = scmp.eq.s32.totalorder %s27, 1
      %p296 = por %p294, %p295
      %p298 = scmp.ne.s32.totalorder %s281, %s297
      %p299 = scmp.eq.s32.totalorder %s27, 0
      %p300 = por %p298, %p299
      %s301 = ssub.s32 %s29, %s36
      %p302 = scmp.eq.s32.totalorder %s301, 0
      %s304 = sadd.s32 %s303, 1
      %s305 = scalar_select %p302, %s303, %s304
      %p308 = pneg %p302
      %p309 = scmp.eq.s32.totalorder %s21, 1
      %p310 = por %p308, %p309
      %p311 = scmp.ne.s32.totalorder %s303, %s306
      %p312 = scmp.eq.s32.totalorder %s21, 0
      %p313 = por %p311, %p312
      %p314 = scmp.ne.s32.totalorder %s303, %s306
      %p315 = scmp.eq.s32.totalorder %s26, 1
      %p316 = por %p314, %p315
      %p317 = scmp.ne.s32.totalorder %s306, %s307
      %p318 = scmp.eq.s32.totalorder %s26, 0
      %p319 = por %p317, %p318
      %p320 = scmp.ne.s32.totalorder %s306, %s307
      %p321 = scmp.eq.s32.totalorder %s27, 1
      %p322 = por %p320, %p321
      %p324 = scmp.ne.s32.totalorder %s307, %s323
      %p325 = scmp.eq.s32.totalorder %s27, 0
      %p326 = por %p324, %p325
      %s327 = ssub.s32 %s29, %s36
      %p328 = scmp.eq.s32.totalorder %s327, 0
      %s330 = sadd.s32 %s329, 1
      %s331 = scalar_select %p328, %s329, %s330
      %p334 = pneg %p328
      %p335 = scmp.eq.s32.totalorder %s21, 1
      %p336 = por %p334, %p335
      %p337 = scmp.ne.s32.totalorder %s329, %s332
      %p338 = scmp.eq.s32.totalorder %s21, 0
      %p339 = por %p337, %p338
      %p340 = scmp.ne.s32.totalorder %s329, %s332
      %p341 = scmp.eq.s32.totalorder %s26, 1
      %p342 = por %p340, %p341
      %p343 = scmp.ne.s32.totalorder %s332, %s333
      %p344 = scmp.eq.s32.totalorder %s26, 0
      %p345 = por %p343, %p344
      %p346 = scmp.ne.s32.totalorder %s332, %s333
      %p347 = scmp.eq.s32.totalorder %s27, 1
      %p348 = por %p346, %p347
      %p350 = scmp.ne.s32.totalorder %s333, %s349
      %p351 = scmp.eq.s32.totalorder %s27, 0
      %p352 = por %p350, %p351
      %s353 = ssub.s32 %s29, %s36
      %p354 = scmp.eq.s32.totalorder %s353, 0
      %s356 = sadd.s32 %s355, 1
      %s357 = scalar_select %p354, %s355, %s356
      %p360 = pneg %p354
      %p361 = scmp.eq.s32.totalorder %s21, 1
      %p362 = por %p360, %p361
      %p363 = scmp.ne.s32.totalorder %s355, %s358
      %p364 = scmp.eq.s32.totalorder %s21, 0
      %p365 = por %p363, %p364
      %p366 = scmp.ne.s32.totalorder %s355, %s358
      %p367 = scmp.eq.s32.totalorder %s26, 1
      %p368 = por %p366, %p367
      %p369 = scmp.ne.s32.totalorder %s358, %s359
      %p370 = scmp.eq.s32.totalorder %s26, 0
      %p371 = por %p369, %p370
      %p372 = scmp.ne.s32.totalorder %s358, %s359
      %p373 = scmp.eq.s32.totalorder %s27, 1
      %p374 = por %p372, %p373
      %p376 = scmp.ne.s32.totalorder %s359, %s375
      %p377 = scmp.eq.s32.totalorder %s27, 0
      %p378 = por %p376, %p377
      %s379 = ssub.s32 %s29, %s36
      %p380 = scmp.eq.s32.totalorder %s379, 0
      %s382 = sadd.s32 %s381, 1
      %s383 = scalar_select %p380, %s381, %s382
      %p386 = pneg %p380
      %p387 = scmp.eq.s32.totalorder %s21, 1
      %p388 = por %p386, %p387
      %p389 = scmp.ne.s32.totalorder %s381, %s384
      %p390 = scmp.eq.s32.totalorder %s21, 0
      %p391 = por %p389, %p390
      %p392 = scmp.ne.s32.totalorder %s381, %s384
      %p393 = scmp.eq.s32.totalorder %s26, 1
      %p394 = por %p392, %p393
      %p395 = scmp.ne.s32.totalorder %s384, %s385
      %p396 = scmp.eq.s32.totalorder %s26, 0
      %p397 = por %p395, %p396
      %p398 = scmp.ne.s32.totalorder %s384, %s385
      %p399 = scmp.eq.s32.totalorder %s27, 1
      %p400 = por %p398, %p399
      %p402 = scmp.ne.s32.totalorder %s385, %s401
      %p403 = scmp.eq.s32.totalorder %s27, 0
      %p404 = por %p402, %p403
      %s405 = ssub.s32 %s28, %s40
      %p406 = scmp.eq.s32.totalorder %s405, 0
      %s408 = sadd.s32 %s407, 1
      %s409 = scalar_select %p406, %s407, %s408
      %p412 = pneg %p406
      %p413 = scmp.eq.s32.totalorder %s21, 1
      %p414 = por %p412, %p413
      %p415 = scmp.ne.s32.totalorder %s407, %s410
      %p416 = scmp.eq.s32.totalorder %s21, 0
      %p417 = por %p415, %p416
      %p418 = scmp.ne.s32.totalorder %s407, %s410
      %p419 = scmp.eq.s32.totalorder %s26, 1
      %p420 = por %p418, %p419
      %p421 = scmp.ne.s32.totalorder %s410, %s411
      %p422 = scmp.eq.s32.totalorder %s26, 0
      %p423 = por %p421, %p422
      %p424 = scmp.ne.s32.totalorder %s410, %s411
      %p425 = scmp.eq.s32.totalorder %s27, 1
      %p426 = por %p424, %p425
      %p428 = scmp.ne.s32.totalorder %s411, %s427
      %p429 = scmp.eq.s32.totalorder %s27, 0
      %p430 = por %p428, %p429
      %p431 = scmp.le.s32.totalorder 1, %s21
      %p432 = scmp.lt.s32.totalorder %s21, 3
      %p433 = pnand %p431, %p432
      %p434 = pneg %p433
      // Predicated region
      $region9: #{tpu_custom_call.1} parent=5 // pred_check
        _
      $region10: #{tpu_custom_call.1} parent=5 // pred_check_branch
        %436 = sbr.rel (%p433) target = $region12
      $region11: #{tpu_custom_call.1} parent=5 // pred_region
        %s437 = ssub.s32 %s21, 1
        // Predicated region
        $region13: #{tpu_custom_call.1} parent=11 // pred_check
          %p438 = pneg %p59
        $region14: #{tpu_custom_call.1} parent=11 // pred_check_branch
          %440 = sbr.rel (%p438) target = $region16
        $region15: #{tpu_custom_call.1} parent=11 // pred_region
          %s441 = smul.u32 2, %s30
          %p442 = scmp.lt.s32.totalorder %s441, 1
          %s443 = scalar_select %p442, %s441, 1
          %s444 = smul.addr %s443, 8
          %s445 = scalar_lea.vmem %s0, %s444
          %s446 = smul.u32 2, %s30
        $region16: #{tpu_custom_call.1} parent=11 // pred_fallthru
          _
        // Predicated region
        $region17: #{tpu_custom_call.1} parent=11 // pred_check
          %p447 = pneg %p85
        $region18: #{tpu_custom_call.1} parent=11 // pred_check_branch
          %449 = sbr.rel (%p447) target = $region20
        $region19: #{tpu_custom_call.1} parent=11 // pred_region
          %s450 = smul.u32 2, %s30
          %p451 = scmp.lt.s32.totalorder %s450, 1
          %s452 = scalar_select %p451, %s450, 1
          %s453 = smul.addr %s452, 8
          %s454 = scalar_lea.vmem %s1, %s453
          %s455 = smul.u32 2, %s30
        $region20: #{tpu_custom_call.1} parent=11 // pred_fallthru
          _
        // Predicated region
        $region21: #{tpu_custom_call.1} parent=11 // pred_check
          %p456 = pneg %p111
        $region22: #{tpu_custom_call.1} parent=11 // pred_check_branch
          %458 = sbr.rel (%p456) target = $region24
        $region23: #{tpu_custom_call.1} parent=11 // pred_region
          %s459 = smul.u32 2, %s30
          %p460 = scmp.lt.s32.totalorder %s459, 1
          %s461 = scalar_select %p460, %s459, 1
          %s462 = smul.addr %s461, 8
          %s463 = scalar_lea.vmem %s2, %s462
          %s464 = smul.u32 2, %s30
        $region24: #{tpu_custom_call.1} parent=11 // pred_fallthru
          _
      $region12: #{tpu_custom_call.1} parent=5 // pred_fallthru
        _
      %p465 = scmp.lt.s32.totalorder %s21, 2
      // Predicated region
      $region25: #{tpu_custom_call.1} parent=5 // pred_check
        %p466 = pneg %p465
      $region26: #{tpu_custom_call.1} parent=5 // pred_check_branch
        %468 = sbr.rel (%p466) target = $region28
      $region27: #{tpu_custom_call.1} parent=5 // pred_region
        // Predicated region
        $region29: #{tpu_custom_call.1} parent=27 // pred_check
          %p469 = pneg %p131
        $region30: #{tpu_custom_call.1} parent=27 // pred_check_branch
          %471 = sbr.rel (%p469) target = $region32
        $region31: #{tpu_custom_call.1} parent=27 // pred_region
          %p472 = scmp.lt.s32.totalorder %s29, 1
          %s473 = scalar_select %p472, %s29, 1
          %s474 = smul.addr %s473, 4
          %s475 = smul.addr %s474, 4
          %s476 = scalar_lea.vmem %s3, %s475
        $region32: #{tpu_custom_call.1} parent=27 // pred_fallthru
          _
        // Predicated region
        $region33: #{tpu_custom_call.1} parent=27 // pred_check
          %p477 = pneg %p157
        $region34: #{tpu_custom_call.1} parent=27 // pred_check_branch
          %479 = sbr.rel (%p477) target = $region36
        $region35: #{tpu_custom_call.1} parent=27 // pred_region
          %p480 = scmp.lt.s32.totalorder %s29, 1
          %s481 = scalar_select %p480, %s29, 1
          %s482 = smul.addr %s481, 4
          %s483 = smul.addr %s482, 4
          %s484 = scalar_lea.vmem %s4, %s483
        $region36: #{tpu_custom_call.1} parent=27 // pred_fallthru
          _
        // Predicated region
        $region37: #{tpu_custom_call.1} parent=27 // pred_check
          %p485 = pneg %p183
        $region38: #{tpu_custom_call.1} parent=27 // pred_check_branch
          %487 = sbr.rel (%p485) target = $region40
        $region39: #{tpu_custom_call.1} parent=27 // pred_region
          %p488 = scmp.lt.s32.totalorder %s29, 1
          %s489 = scalar_select %p488, %s29, 1
          %s490 = scalar_lea.vmem %s5, %s489
        $region40: #{tpu_custom_call.1} parent=27 // pred_fallthru
          _
        // Predicated region
        $region41: #{tpu_custom_call.1} parent=27 // pred_check
          %p491 = pneg %p209
        $region42: #{tpu_custom_call.1} parent=27 // pred_check_branch
          %493 = sbr.rel (%p491) target = $region44
        $region43: #{tpu_custom_call.1} parent=27 // pred_region
          %p494 = scmp.lt.s32.totalorder %s29, 1
          %s495 = scalar_select %p494, %s29, 1
          %s496 = scalar_lea.vmem %s6, %s495
        $region44: #{tpu_custom_call.1} parent=27 // pred_fallthru
          _
        // Predicated region
        $region45: #{tpu_custom_call.1} parent=27 // pred_check
          %p497 = pneg %p235
        $region46: #{tpu_custom_call.1} parent=27 // pred_check_branch
          %499 = sbr.rel (%p497) target = $region48
        $region47: #{tpu_custom_call.1} parent=27 // pred_region
          %p500 = scmp.lt.s32.totalorder %s29, 1
          %s501 = scalar_select %p500, %s29, 1
          %s502 = scalar_lea.vmem %s7, %s501
        $region48: #{tpu_custom_call.1} parent=27 // pred_fallthru
          _
        // Predicated region
        $region49: #{tpu_custom_call.1} parent=27 // pred_check
          %p503 = pneg %p261
        $region50: #{tpu_custom_call.1} parent=27 // pred_check_branch
          %505 = sbr.rel (%p503) target = $region52
        $region51: #{tpu_custom_call.1} parent=27 // pred_region
          %p506 = scmp.lt.s32.totalorder %s29, 1
          %s507 = scalar_select %p506, %s29, 1
          %s508 = smul.addr %s507, 4
          %s509 = smul.addr %s508, 4
          %s510 = scalar_lea.vmem %s8, %s509
        $region52: #{tpu_custom_call.1} parent=27 // pred_fallthru
          _
        // Predicated region
        $region53: #{tpu_custom_call.1} parent=27 // pred_check
          %p511 = pneg %p287
        $region54: #{tpu_custom_call.1} parent=27 // pred_check_branch
          %513 = sbr.rel (%p511) target = $region56
        $region55: #{tpu_custom_call.1} parent=27 // pred_region
          %p514 = scmp.lt.s32.totalorder %s29, 1
          %s515 = scalar_select %p514, %s29, 1
          %s516 = scalar_lea.vmem %s9, %s515
        $region56: #{tpu_custom_call.1} parent=27 // pred_fallthru
          _
        // Predicated region
        $region57: #{tpu_custom_call.1} parent=27 // pred_check
          %p517 = pneg %p313
        $region58: #{tpu_custom_call.1} parent=27 // pred_check_branch
          %519 = sbr.rel (%p517) target = $region60
        $region59: #{tpu_custom_call.1} parent=27 // pred_region
          %p520 = scmp.lt.s32.totalorder %s29, 1
          %s521 = scalar_select %p520, %s29, 1
          %s522 = smul.addr %s521, 16
          %s523 = smul.addr %s522, 4
          %s524 = scalar_lea.vmem %s10, %s523
        $region60: #{tpu_custom_call.1} parent=27 // pred_fallthru
          _
        // Predicated region
        $region61: #{tpu_custom_call.1} parent=27 // pred_check
          %p525 = pneg %p339
        $region62: #{tpu_custom_call.1} parent=27 // pred_check_branch
          %527 = sbr.rel (%p525) target = $region64
        $region63: #{tpu_custom_call.1} parent=27 // pred_region
          %p528 = scmp.lt.s32.totalorder %s29, 1
          %s529 = scalar_select %p528, %s29, 1
          %s530 = scalar_lea.vmem %s11, %s529
        $region64: #{tpu_custom_call.1} parent=27 // pred_fallthru
          _
        // Predicated region
        $region65: #{tpu_custom_call.1} parent=27 // pred_check
          %p531 = pneg %p365
        $region66: #{tpu_custom_call.1} parent=27 // pred_check_branch
          %533 = sbr.rel (%p531) target = $region68
        $region67: #{tpu_custom_call.1} parent=27 // pred_region
          %p534 = scmp.lt.s32.totalorder %s29, 1
          %s535 = scalar_select %p534, %s29, 1
          %s536 = scalar_lea.vmem %s12, %s535
        $region68: #{tpu_custom_call.1} parent=27 // pred_fallthru
          _
        // Predicated region
        $region69: #{tpu_custom_call.1} parent=27 // pred_check
          %p537 = pneg %p391
        $region70: #{tpu_custom_call.1} parent=27 // pred_check_branch
          %539 = sbr.rel (%p537) target = $region72
        $region71: #{tpu_custom_call.1} parent=27 // pred_region
          %p540 = scmp.lt.s32.totalorder %s29, 1
          %s541 = scalar_select %p540, %s29, 1
          %s542 = scalar_lea.vmem %s13, %s541
        $region72: #{tpu_custom_call.1} parent=27 // pred_fallthru
          _
      $region28: #{tpu_custom_call.1} parent=5 // pred_fallthru
        _
      %p543 = scmp.le.s32.totalorder 1, %s21
      %p544 = scmp.lt.s32.totalorder %s21, 3
      %p545 = pnand %p543, %p544
      %p546 = pneg %p545
      // Predicated region
      $region73: #{tpu_custom_call.1} parent=5 // pred_check
        _
      $region74: #{tpu_custom_call.1} parent=5 // pred_check_branch
        %548 = sbr.rel (%p545) target = $region76
      $region75: #{tpu_custom_call.1} parent=5 // pred_region
        %s549 = ssub.s32 %s21, 1
        %s550 = smul.u32 2, %s30
        %p551 = scmp.lt.s32.totalorder %s550, 1
        %s552 = scalar_select %p551, %s550, 1
        %s553 = smul.addr %s552, 8
        %s554 = scalar_lea.vmem %s0, %s553
        %p555 = pneg %p59
        %p556 = pneg %p56
        %s557 = smul.u32 2, %s30
        %p558 = scmp.lt.s32.totalorder %s557, 1
        %s559 = scalar_select %p558, %s557, 1
        %s560 = smul.addr %s559, 8
        %s561 = scalar_lea.vmem %s1, %s560
        %p562 = pneg %p85
        %p563 = pneg %p82
        %s564 = smul.u32 2, %s30
        %p565 = scmp.lt.s32.totalorder %s564, 1
        %s566 = scalar_select %p565, %s564, 1
        %s567 = smul.addr %s566, 8
        %s568 = scalar_lea.vmem %s2, %s567
        %p569 = pneg %p111
        %p570 = pneg %p108
        %p571 = scmp.lt.s32.totalorder %s31, 1
        %s572 = scalar_select %p571, %s31, 1
        %s573 = smul.addr %s572, 4
        %s574 = smul.addr %s573, 4
        %s575 = scalar_lea.vmem %s3, %s574
        %p576 = pneg %p137
        %p577 = pneg %p134
        %p578 = scmp.lt.s32.totalorder %s31, 1
        %s579 = scalar_select %p578, %s31, 1
        %s580 = smul.addr %s579, 4
        %s581 = smul.addr %s580, 4
        %s582 = scalar_lea.vmem %s4, %s581
        %p583 = pneg %p163
        %p584 = pneg %p160
        %p585 = scmp.lt.s32.totalorder %s31, 1
        %s586 = scalar_select %p585, %s31, 1
        %s587 = scalar_lea.vmem %s5, %s586
        %p588 = pneg %p189
        %p589 = pneg %p186
        %p590 = scmp.lt.s32.totalorder %s31, 1
        %s591 = scalar_select %p590, %s31, 1
        %s592 = scalar_lea.vmem %s6, %s591
        %p593 = pneg %p215
        %p594 = pneg %p212
        %p595 = scmp.lt.s32.totalorder %s31, 1
        %s596 = scalar_select %p595, %s31, 1
        %s597 = scalar_lea.vmem %s7, %s596
        %p598 = pneg %p241
        %p599 = pneg %p238
        %p600 = scmp.lt.s32.totalorder %s31, 1
        %s601 = scalar_select %p600, %s31, 1
        %s602 = smul.addr %s601, 4
        %s603 = smul.addr %s602, 4
        %s604 = scalar_lea.vmem %s8, %s603
        %p605 = pneg %p267
        %p606 = pneg %p264
        %p607 = scmp.lt.s32.totalorder %s31, 1
        %s608 = scalar_select %p607, %s31, 1
        %s609 = scalar_lea.vmem %s9, %s608
        %p610 = pneg %p293
        %p611 = pneg %p290
        %p612 = scmp.lt.s32.totalorder %s31, 1
        %s613 = scalar_select %p612, %s31, 1
        %s614 = smul.addr %s613, 16
        %s615 = smul.addr %s614, 4
        %s616 = scalar_lea.vmem %s10, %s615
        %p617 = pneg %p319
        %p618 = pneg %p316
        %p619 = scmp.lt.s32.totalorder %s31, 1
        %s620 = scalar_select %p619, %s31, 1
        %s621 = scalar_lea.vmem %s11, %s620
        %p622 = pneg %p345
        %p623 = pneg %p342
        %p624 = scmp.lt.s32.totalorder %s31, 1
        %s625 = scalar_select %p624, %s31, 1
        %s626 = scalar_lea.vmem %s12, %s625
        %p627 = pneg %p371
        %p628 = pneg %p368
        %p629 = scmp.lt.s32.totalorder %s31, 1
        %s630 = scalar_select %p629, %s31, 1
        %s631 = scalar_lea.vmem %s13, %s630
        %p632 = pneg %p397
        %p633 = pneg %p394
        %p634 = pneg %p423
        %p635 = pneg %p420
        %s636 = smul.u32 2, %s30
        %p637 = scmp.lt.s32.totalorder %s636, 1
        %s638 = scalar_select %p637, %s636, 1
        %s639 = smul.addr %s638, 8
        %s640 = scalar_lea.vmem %s0, %s639
        %s641 = smul.u32 2, %s30
        %s642 = smul.u32 2, %s30
        %p643 = scmp.lt.s32.totalorder %s642, 1
        %s644 = scalar_select %p643, %s642, 1
        %s645 = smul.addr %s644, 8
        %s646 = scalar_lea.vmem %s1, %s645
        %s647 = smul.u32 2, %s30
        %s648 = smul.u32 2, %s30
        %p649 = scmp.lt.s32.totalorder %s648, 1
        %s650 = scalar_select %p649, %s648, 1
        %s651 = smul.addr %s650, 8
        %s652 = scalar_lea.vmem %s2, %s651
        %s653 = smul.u32 2, %s30
        %p654 = scmp.lt.s32.totalorder %s31, 1
        %s655 = scalar_select %p654, %s31, 1
        %s656 = smul.addr %s655, 4
        %s657 = smul.addr %s656, 4
        %s658 = scalar_lea.vmem %s3, %s657
        %p659 = scmp.lt.s32.totalorder %s31, 1
        %s660 = scalar_select %p659, %s31, 1
        %s661 = smul.addr %s660, 4
        %s662 = smul.addr %s661, 4
        %s663 = scalar_lea.vmem %s4, %s662
        %p664 = scmp.lt.s32.totalorder %s31, 1
        %s665 = scalar_select %p664, %s31, 1
        %s666 = scalar_lea.vmem %s5, %s665
        %p667 = scmp.lt.s32.totalorder %s31, 1
        %s668 = scalar_select %p667, %s31, 1
        %s669 = scalar_lea.vmem %s6, %s668
        %p670 = scmp.lt.s32.totalorder %s31, 1
        %s671 = scalar_select %p670, %s31, 1
        %s672 = scalar_lea.vmem %s7, %s671
        %p673 = scmp.lt.s32.totalorder %s31, 1
        %s674 = scalar_select %p673, %s31, 1
        %s675 = smul.addr %s674, 4
        %s676 = smul.addr %s675, 4
        %s677 = scalar_lea.vmem %s8, %s676
        %p678 = scmp.lt.s32.totalorder %s31, 1
        %s679 = scalar_select %p678, %s31, 1
        %s680 = scalar_lea.vmem %s9, %s679
        %p681 = scmp.lt.s32.totalorder %s31, 1
        %s682 = scalar_select %p681, %s31, 1
        %s683 = smul.addr %s682, 16
        %s684 = smul.addr %s683, 4
        %s685 = scalar_lea.vmem %s10, %s684
        %p686 = scmp.lt.s32.totalorder %s31, 1
        %s687 = scalar_select %p686, %s31, 1
        %s688 = scalar_lea.vmem %s11, %s687
        %p689 = scmp.lt.s32.totalorder %s31, 1
        %s690 = scalar_select %p689, %s31, 1
        %s691 = scalar_lea.vmem %s12, %s690
        %p692 = scmp.lt.s32.totalorder %s31, 1
        %s693 = scalar_select %p692, %s31, 1
        %s694 = scalar_lea.vmem %s13, %s693
        %s695 = smul.u32 2, %s30
        %p697 = scmp.eq.s32.totalorder %s31, 0
        // Predicated region
        $region77: #{tpu_custom_call.1} parent=75 // pred_check
          %p698 = pneg %p697
        $region78: #{tpu_custom_call.1} parent=75 // pred_check_branch
          %700 = sbr.rel (%p698) target = $region80
        $region79: #{tpu_custom_call.1} parent=75 // pred_region
          %v701 = vld [vmem:[%s640] sm:$0xff]
          %v702 = vld [vmem:[%s640 + $0x8] sm:$0xff]
          %v703 = vld [vmem:[%s646] sm:$0xff]
          %v704 = vld [vmem:[%s646 + $0x8] sm:$0xff]
          %v705 = vadd.f32 %v701, %v703
          %v706 = vadd.f32 %v702, %v704
          %v707 = vld [vmem:[%s652] sm:$0xff]
          %v708 = vld [vmem:[%s652 + $0x8] sm:$0xff]
          %v709 = vadd.f32 %v705, %v707
          %v710 = vadd.f32 %v706, %v708
          %vm711 = vcmask 261120
          %712 = vst.msk [vmem:[#allocation2] sm:$0xff] %vm711, %v709
          %713 = vst.msk [vmem:[#allocation2 + $0x8] sm:$0xff] %vm711, %v710
        $region80: #{tpu_custom_call.1} parent=75 // pred_fallthru
          _
        %v714 = vld [vmem:[#allocation2] sm:$0xff]
        %v715 = vld [vmem:[#allocation2 + $0x8] sm:$0xff]
        %v716 = vpack.c.bf16 %v715, %v714
        %v717 = vld [vmem:[%s658] sm:$0xf]
        %v718 = vld [vmem:[%s658 + $0x4] sm:$0xf]
        %v719 = vld [vmem:[%s658 + $0x8] sm:$0xf]
        %v720 = vld [vmem:[%s658 + $0xc] sm:$0xf]
        %v725 = vunpack.c.l.b16 %v717
        %v726 = vunpack.c.l.b16 %v718
        %v727 = vunpack.c.l.b16 %v719
        %v728 = vunpack.c.l.b16 %v720
        %v729 = vpack.c.b16 %v726, %v725
        %v730 = vpack.c.b16 %v728, %v727
        %vm733 = vcmask 261120
        %v735 = vsel %vm733, %v716, 0
        %737 = vmatpush.bf16.msra.mxu0 0
        %738 = vmatpush.bf16.msra.mxu0 0
        %739 = vmatpush.bf16.msra.mxu0 0
        %740 = vmatpush.bf16.msra.mxu0 0
        %741 = vmatpush.bf16.msra.mxu0 0
        %742 = vmatpush.bf16.msra.mxu0 0
        %743 = vmatpush.bf16.msra.mxu0 %v730
        %744 = vmatpush.bf16.msra.mxu0 %v729
        %745 = vmatmul.bf16.gmra.mxu0 %v735
        %v746 = vpop.f32.mrf.mxu0
        %v747 = vadd.f32 0.0, %v746
        %v748 = vpop.f32.mrf.mxu0
        %v749 = vadd.f32 0.0, %v748
        %750 = vdwg.mxu0
        %753 = vrot.lane.b32.xlu0 %v747, 120
        %v754 = vpop.permute.xlu0 %753
        %755 = vrot.lane.b32.xlu0 %v749, 120
        %v756 = vpop.permute.xlu0 %755
        %759 = vrot.lane.b32.xlu0 %v747, 112
        %v760 = vpop.permute.xlu0 %759
        %761 = vrot.lane.b32.xlu0 %v749, 112
        %v762 = vpop.permute.xlu0 %761
        %765 = vrot.lane.b32.xlu0 %v747, 104
        %v766 = vpop.permute.xlu0 %765
        %767 = vrot.lane.b32.xlu0 %v749, 104
        %v768 = vpop.permute.xlu0 %767
        %771 = vrot.lane.b32.xlu0 %v747, 96
        %v772 = vpop.permute.xlu0 %771
        %773 = vrot.lane.b32.xlu0 %v749, 96
        %v774 = vpop.permute.xlu0 %773
        %777 = vrot.lane.b32.xlu0 %v747, 88
        %v778 = vpop.permute.xlu0 %777
        %779 = vrot.lane.b32.xlu0 %v749, 88
        %v780 = vpop.permute.xlu0 %779
        %783 = vrot.lane.b32.xlu0 %v747, 80
        %v784 = vpop.permute.xlu0 %783
        %785 = vrot.lane.b32.xlu0 %v749, 80
        %v786 = vpop.permute.xlu0 %785
        %789 = vrot.lane.b32.xlu0 %v747, 72
        %v790 = vpop.permute.xlu0 %789
        %791 = vrot.lane.b32.xlu0 %v749, 72
        %v792 = vpop.permute.xlu0 %791
        %795 = vrot.lane.b32.xlu0 %v747, 64
        %v796 = vpop.permute.xlu0 %795
        %797 = vrot.lane.b32.xlu0 %v749, 64
        %v798 = vpop.permute.xlu0 %797
        %801 = vrot.lane.b32.xlu0 %v747, 56
        %v802 = vpop.permute.xlu0 %801
        %803 = vrot.lane.b32.xlu0 %v749, 56
        %v804 = vpop.permute.xlu0 %803
        %807 = vrot.lane.b32.xlu0 %v747, 48
        %v808 = vpop.permute.xlu0 %807
        %809 = vrot.lane.b32.xlu0 %v749, 48
        %v810 = vpop.permute.xlu0 %809
        %813 = vrot.lane.b32.xlu0 %v747, 40
        %v814 = vpop.permute.xlu0 %813
        %815 = vrot.lane.b32.xlu0 %v749, 40
        %v816 = vpop.permute.xlu0 %815
        %v819 = vrot.slane %v760, 4
        %vm820 = vcmask 1047556
        %v821 = vsel %vm820, %v819, %v747
        %v822 = vrot.slane %v747, 4
        %v823 = vsel %vm820, %v760, %v822
        %v825 = vunpack.c.l.s4 1983009808
        %v826 = vunpack.c.0.s8 %v825
        %v827 = vperm.slane %v821, %v826
        %v829 = vunpack.c.l.s4 1983009808
        %v830 = vunpack.c.0.s8 %v829
        %v831 = vperm.slane %v823, %v830
        %v832 = vrot.slane %v766, 4
        %v833 = vsel %vm820, %v832, %v754
        %v834 = vrot.slane %v754, 4
        %v835 = vsel %vm820, %v766, %v834
        %v837 = vunpack.c.l.s4 1983009808
        %v838 = vunpack.c.0.s8 %v837
        %v839 = vperm.slane %v833, %v838
        %v841 = vunpack.c.l.s4 1983009808
        %v842 = vunpack.c.0.s8 %v841
        %v843 = vperm.slane %v835, %v842
        %v844 = vrot.slane %v784, 4
        %v845 = vsel %vm820, %v844, %v772
        %v846 = vrot.slane %v772, 4
        %v847 = vsel %vm820, %v784, %v846
        %v849 = vunpack.c.l.s4 1983009808
        %v850 = vunpack.c.0.s8 %v849
        %v851 = vperm.slane %v845, %v850
        %v853 = vunpack.c.l.s4 1983009808
        %v854 = vunpack.c.0.s8 %v853
        %v855 = vperm.slane %v847, %v854
        %v856 = vrot.slane %v790, 4
        %v857 = vsel %vm820, %v856, %v778
        %v858 = vrot.slane %v778, 4
        %v859 = vsel %vm820, %v790, %v858
        %v861 = vunpack.c.l.s4 1983009808
        %v862 = vunpack.c.0.s8 %v861
        %v863 = vperm.slane %v857, %v862
        %v865 = vunpack.c.l.s4 1983009808
        %v866 = vunpack.c.0.s8 %v865
        %v867 = vperm.slane %v859, %v866
        %v868 = vrot.slane %v839, 4
        %v869 = vsel %vm820, %v868, %v827
        %v870 = vrot.slane %v827, 4
        %v871 = vsel %vm820, %v839, %v870
        %v873 = vunpack.c.l.s4 1934713408
        %v874 = vunpack.c.0.s8 %v873
        %v875 = vperm.slane %v869, %v874
        %v877 = vunpack.c.l.s4 1934713408
        %v878 = vunpack.c.0.s8 %v877
        %v879 = vperm.slane %v871, %v878
        %v880 = vrot.slane %v843, 4
        %v881 = vsel %vm820, %v880, %v831
        %v882 = vrot.slane %v831, 4
        %v883 = vsel %vm820, %v843, %v882
        %v885 = vunpack.c.l.s4 1934713408
        %v886 = vunpack.c.0.s8 %v885
        %v887 = vperm.slane %v881, %v886
        %v889 = vunpack.c.l.s4 1934713408
        %v890 = vunpack.c.0.s8 %v889
        %v891 = vperm.slane %v883, %v890
        %v892 = vrot.slane %v863, 4
        %v893 = vsel %vm820, %v892, %v851
        %v894 = vrot.slane %v851, 4
        %v895 = vsel %vm820, %v863, %v894
        %v897 = vunpack.c.l.s4 1934713408
        %v898 = vunpack.c.0.s8 %v897
        %v899 = vperm.slane %v893, %v898
        %v901 = vunpack.c.l.s4 1934713408
        %v902 = vunpack.c.0.s8 %v901
        %v903 = vperm.slane %v895, %v902
        %v904 = vrot.slane %v867, 4
        %v905 = vsel %vm820, %v904, %v855
        %v906 = vrot.slane %v855, 4
        %v907 = vsel %vm820, %v867, %v906
        %v909 = vunpack.c.l.s4 1934713408
        %v910 = vunpack.c.0.s8 %v909
        %v911 = vperm.slane %v905, %v910
        %v913 = vunpack.c.l.s4 1934713408
        %v914 = vunpack.c.0.s8 %v913
        %v915 = vperm.slane %v907, %v914
        %v916 = vrot.slane %v899, 4
        %v917 = vsel %vm820, %v916, %v875
        %v918 = vrot.slane %v875, 4
        %v919 = vsel %vm820, %v899, %v918
        %v920 = vrot.slane %v903, 4
        %v921 = vsel %vm820, %v920, %v879
        %v922 = vrot.slane %v879, 4
        %v923 = vsel %vm820, %v903, %v922
        %v924 = vrot.slane %v911, 4
        %v925 = vsel %vm820, %v924, %v887
        %v926 = vrot.slane %v887, 4
        %v927 = vsel %vm820, %v911, %v926
        %v928 = vrot.slane %v915, 4
        %v929 = vsel %vm820, %v928, %v891
        %v930 = vrot.slane %v891, 4
        %v931 = vsel %vm820, %v915, %v930
        %v932 = vrot.slane %v808, 4
        %v933 = vsel %vm820, %v932, %v796
        %v934 = vrot.slane %v796, 4
        %v935 = vsel %vm820, %v808, %v934
        %v937 = vunpack.c.l.s4 1983009808
        %v938 = vunpack.c.0.s8 %v937
        %v939 = vperm.slane %v933, %v938
        %v941 = vunpack.c.l.s4 1983009808
        %v942 = vunpack.c.0.s8 %v941
        %v943 = vperm.slane %v935, %v942
        %v944 = vrot.slane %v814, 4
        %v945 = vsel %vm820, %v944, %v802
        %v946 = vrot.slane %v802, 4
        %v947 = vsel %vm820, %v814, %v946
        %v949 = vunpack.c.l.s4 1983009808
        %v950 = vunpack.c.0.s8 %v949
        %v951 = vperm.slane %v945, %v950
        %v953 = vunpack.c.l.s4 1983009808
        %v954 = vunpack.c.0.s8 %v953
        %v955 = vperm.slane %v947, %v954
        %v956 = vrot.slane %v951, 4
        %v957 = vsel %vm820, %v956, %v939
        %v958 = vrot.slane %v939, 4
        %v959 = vsel %vm820, %v951, %v958
        %v961 = vunpack.c.l.s4 1934713408
        %v962 = vunpack.c.0.s8 %v961
        %v963 = vperm.slane %v957, %v962
        %v965 = vunpack.c.l.s4 1934713408
        %v966 = vunpack.c.0.s8 %v965
        %v967 = vperm.slane %v959, %v966
        %v968 = vrot.slane %v955, 4
        %v969 = vsel %vm820, %v968, %v943
        %v970 = vrot.slane %v943, 4
        %v971 = vsel %vm820, %v955, %v970
        %v973 = vunpack.c.l.s4 1934713408
        %v974 = vunpack.c.0.s8 %v973
        %v975 = vperm.slane %v969, %v974
        %v977 = vunpack.c.l.s4 1934713408
        %v978 = vunpack.c.0.s8 %v977
        %v979 = vperm.slane %v971, %v978
        %v980 = vrot.slane %v963, 4
        %v981 = vsel %vm820, 0.0, %v980
        %v982 = vrot.slane %v967, 4
        %v983 = vsel %vm820, 0.0, %v982
        %v984 = vrot.slane %v975, 4
        %v985 = vsel %vm820, 0.0, %v984
        %v986 = vrot.slane %v979, 4
        %v987 = vsel %vm820, 0.0, %v986
        %v988 = vrot.slane %v762, 4
        %v989 = vsel %vm820, %v988, %v749
        %v990 = vrot.slane %v749, 4
        %v991 = vsel %vm820, %v762, %v990
        %v993 = vunpack.c.l.s4 1983009808
        %v994 = vunpack.c.0.s8 %v993
        %v995 = vperm.slane %v989, %v994
        %v997 = vunpack.c.l.s4 1983009808
        %v998 = vunpack.c.0.s8 %v997
        %v999 = vperm.slane %v991, %v998
        %v1000 = vrot.slane %v768, 4
        %v1001 = vsel %vm820, %v1000, %v756
        %v1002 = vrot.slane %v756, 4
        %v1003 = vsel %vm820, %v768, %v1002
        %v1005 = vunpack.c.l.s4 1983009808
        %v1006 = vunpack.c.0.s8 %v1005
        %v1007 = vperm.slane %v1001, %v1006
        %v1009 = vunpack.c.l.s4 1983009808
        %v1010 = vunpack.c.0.s8 %v1009
        %v1011 = vperm.slane %v1003, %v1010
        %v1012 = vrot.slane %v786, 4
        %v1013 = vsel %vm820, %v1012, %v774
        %v1014 = vrot.slane %v774, 4
        %v1015 = vsel %vm820, %v786, %v1014
        %v1017 = vunpack.c.l.s4 1983009808
        %v1018 = vunpack.c.0.s8 %v1017
        %v1019 = vperm.slane %v1013, %v1018
        %v1021 = vunpack.c.l.s4 1983009808
        %v1022 = vunpack.c.0.s8 %v1021
        %v1023 = vperm.slane %v1015, %v1022
        %v1024 = vrot.slane %v792, 4
        %v1025 = vsel %vm820, %v1024, %v780
        %v1026 = vrot.slane %v780, 4
        %v1027 = vsel %vm820, %v792, %v1026
        %v1029 = vunpack.c.l.s4 1983009808
        %v1030 = vunpack.c.0.s8 %v1029
        %v1031 = vperm.slane %v1025, %v1030
        %v1033 = vunpack.c.l.s4 1983009808
        %v1034 = vunpack.c.0.s8 %v1033
        %v1035 = vperm.slane %v1027, %v1034
        %v1036 = vrot.slane %v1007, 4
        %v1037 = vsel %vm820, %v1036, %v995
        %v1038 = vrot.slane %v995, 4
        %v1039 = vsel %vm820, %v1007, %v1038
        %v1041 = vunpack.c.l.s4 1934713408
        %v1042 = vunpack.c.0.s8 %v1041
        %v1043 = vperm.slane %v1037, %v1042
        %v1045 = vunpack.c.l.s4 1934713408
        %v1046 = vunpack.c.0.s8 %v1045
        %v1047 = vperm.slane %v1039, %v1046
        %v1048 = vrot.slane %v1011, 4
        %v1049 = vsel %vm820, %v1048, %v999
        %v1050 = vrot.slane %v999, 4
        %v1051 = vsel %vm820, %v1011, %v1050
        %v1053 = vunpack.c.l.s4 1934713408
        %v1054 = vunpack.c.0.s8 %v1053
        %v1055 = vperm.slane %v1049, %v1054
        %v1057 = vunpack.c.l.s4 1934713408
        %v1058 = vunpack.c.0.s8 %v1057
        %v1059 = vperm.slane %v1051, %v1058
        %v1060 = vrot.slane %v1031, 4
        %v1061 = vsel %vm820, %v1060, %v1019
        %v1062 = vrot.slane %v1019, 4
        %v1063 = vsel %vm820, %v1031, %v1062
        %v1065 = vunpack.c.l.s4 1934713408
        %v1066 = vunpack.c.0.s8 %v1065
        %v1067 = vperm.slane %v1061, %v1066
        %v1069 = vunpack.c.l.s4 1934713408
        %v1070 = vunpack.c.0.s8 %v1069
        %v1071 = vperm.slane %v1063, %v1070
        %v1072 = vrot.slane %v1035, 4
        %v1073 = vsel %vm820, %v1072, %v1023
        %v1074 = vrot.slane %v1023, 4
        %v1075 = vsel %vm820, %v1035, %v1074
        %v1077 = vunpack.c.l.s4 1934713408
        %v1078 = vunpack.c.0.s8 %v1077
        %v1079 = vperm.slane %v1073, %v1078
        %v1081 = vunpack.c.l.s4 1934713408
        %v1082 = vunpack.c.0.s8 %v1081
        %v1083 = vperm.slane %v1075, %v1082
        %v1084 = vrot.slane %v1067, 4
        %v1085 = vsel %vm820, %v1084, %v1043
        %v1086 = vrot.slane %v1043, 4
        %v1087 = vsel %vm820, %v1067, %v1086
        %v1088 = vrot.slane %v1071, 4
        %v1089 = vsel %vm820, %v1088, %v1047
        %v1090 = vrot.slane %v1047, 4
        %v1091 = vsel %vm820, %v1071, %v1090
        %v1092 = vrot.slane %v1079, 4
        %v1093 = vsel %vm820, %v1092, %v1055
        %v1094 = vrot.slane %v1055, 4
        %v1095 = vsel %vm820, %v1079, %v1094
        %v1096 = vrot.slane %v1083, 4
        %v1097 = vsel %vm820, %v1096, %v1059
        %v1098 = vrot.slane %v1059, 4
        %v1099 = vsel %vm820, %v1083, %v1098
        %v1100 = vrot.slane %v810, 4
        %v1101 = vsel %vm820, %v1100, %v798
        %v1102 = vrot.slane %v798, 4
        %v1103 = vsel %vm820, %v810, %v1102
        %v1105 = vunpack.c.l.s4 1983009808
        %v1106 = vunpack.c.0.s8 %v1105
        %v1107 = vperm.slane %v1101, %v1106
        %v1109 = vunpack.c.l.s4 1983009808
        %v1110 = vunpack.c.0.s8 %v1109
        %v1111 = vperm.slane %v1103, %v1110
        %v1112 = vrot.slane %v816, 4
        %v1113 = vsel %vm820, %v1112, %v804
        %v1114 = vrot.slane %v804, 4
        %v1115 = vsel %vm820, %v816, %v1114
        %v1117 = vunpack.c.l.s4 1983009808
        %v1118 = vunpack.c.0.s8 %v1117
        %v1119 = vperm.slane %v1113, %v1118
        %v1121 = vunpack.c.l.s4 1983009808
        %v1122 = vunpack.c.0.s8 %v1121
        %v1123 = vperm.slane %v1115, %v1122
        %v1124 = vrot.slane %v1119, 4
        %v1125 = vsel %vm820, %v1124, %v1107
        %v1126 = vrot.slane %v1107, 4
        %v1127 = vsel %vm820, %v1119, %v1126
        %v1129 = vunpack.c.l.s4 1934713408
        %v1130 = vunpack.c.0.s8 %v1129
        %v1131 = vperm.slane %v1125, %v1130
        %v1133 = vunpack.c.l.s4 1934713408
        %v1134 = vunpack.c.0.s8 %v1133
        %v1135 = vperm.slane %v1127, %v1134
        %v1136 = vrot.slane %v1123, 4
        %v1137 = vsel %vm820, %v1136, %v1111
        %v1138 = vrot.slane %v1111, 4
        %v1139 = vsel %vm820, %v1123, %v1138
        %v1141 = vunpack.c.l.s4 1934713408
        %v1142 = vunpack.c.0.s8 %v1141
        %v1143 = vperm.slane %v1137, %v1142
        %v1145 = vunpack.c.l.s4 1934713408
        %v1146 = vunpack.c.0.s8 %v1145
        %v1147 = vperm.slane %v1139, %v1146
        %v1148 = vrot.slane %v1131, 4
        %v1149 = vsel %vm820, 0.0, %v1148
        %v1150 = vrot.slane %v1135, 4
        %v1151 = vsel %vm820, 0.0, %v1150
        %v1152 = vrot.slane %v1143, 4
        %v1153 = vsel %vm820, 0.0, %v1152
        %v1154 = vrot.slane %v1147, 4
        %v1155 = vsel %vm820, 0.0, %v1154
        %v1156 = vrot.slane %v921, 4
        %v1157 = vsel %vm820, %v1156, %v917
        %v1158 = vrot.slane %v917, 4
        %v1159 = vsel %vm820, %v921, %v1158
        %v1161 = vunpack.c.l.s4 1983009808
        %v1162 = vunpack.c.0.s8 %v1161
        %v1163 = vperm.slane %v1157, %v1162
        %v1165 = vunpack.c.l.s4 1983009808
        %v1166 = vunpack.c.0.s8 %v1165
        %v1167 = vperm.slane %v1159, %v1166
        %v1168 = vrot.slane %v923, 4
        %v1169 = vsel %vm820, %v1168, %v919
        %v1170 = vrot.slane %v919, 4
        %v1171 = vsel %vm820, %v923, %v1170
        %v1173 = vunpack.c.l.s4 1983009808
        %v1174 = vunpack.c.0.s8 %v1173
        %v1175 = vperm.slane %v1169, %v1174
        %v1177 = vunpack.c.l.s4 1983009808
        %v1178 = vunpack.c.0.s8 %v1177
        %v1179 = vperm.slane %v1171, %v1178
        %v1180 = vrot.slane %v929, 4
        %v1181 = vsel %vm820, %v1180, %v925
        %v1182 = vrot.slane %v925, 4
        %v1183 = vsel %vm820, %v929, %v1182
        %v1185 = vunpack.c.l.s4 1983009808
        %v1186 = vunpack.c.0.s8 %v1185
        %v1187 = vperm.slane %v1181, %v1186
        %v1189 = vunpack.c.l.s4 1983009808
        %v1190 = vunpack.c.0.s8 %v1189
        %v1191 = vperm.slane %v1183, %v1190
        %v1192 = vrot.slane %v931, 4
        %v1193 = vsel %vm820, %v1192, %v927
        %v1194 = vrot.slane %v927, 4
        %v1195 = vsel %vm820, %v931, %v1194
        %v1197 = vunpack.c.l.s4 1983009808
        %v1198 = vunpack.c.0.s8 %v1197
        %v1199 = vperm.slane %v1193, %v1198
        %v1201 = vunpack.c.l.s4 1983009808
        %v1202 = vunpack.c.0.s8 %v1201
        %v1203 = vperm.slane %v1195, %v1202
        %v1204 = vrot.slane %v1175, 4
        %v1205 = vsel %vm820, %v1204, %v1163
        %v1206 = vrot.slane %v1163, 4
        %v1207 = vsel %vm820, %v1175, %v1206
        %v1209 = vunpack.c.l.s4 1934713408
        %v1210 = vunpack.c.0.s8 %v1209
        %v1211 = vperm.slane %v1205, %v1210
        %v1213 = vunpack.c.l.s4 1934713408
        %v1214 = vunpack.c.0.s8 %v1213
        %v1215 = vperm.slane %v1207, %v1214
        %v1216 = vrot.slane %v1179, 4
        %v1217 = vsel %vm820, %v1216, %v1167
        %v1218 = vrot.slane %v1167, 4
        %v1219 = vsel %vm820, %v1179, %v1218
        %v1221 = vunpack.c.l.s4 1934713408
        %v1222 = vunpack.c.0.s8 %v1221
        %v1223 = vperm.slane %v1217, %v1222
        %v1225 = vunpack.c.l.s4 1934713408
        %v1226 = vunpack.c.0.s8 %v1225
        %v1227 = vperm.slane %v1219, %v1226
        %v1228 = vrot.slane %v1199, 4
        %v1229 = vsel %vm820, %v1228, %v1187
        %v1230 = vrot.slane %v1187, 4
        %v1231 = vsel %vm820, %v1199, %v1230
        %v1233 = vunpack.c.l.s4 1934713408
        %v1234 = vunpack.c.0.s8 %v1233
        %v1235 = vperm.slane %v1229, %v1234
        %v1237 = vunpack.c.l.s4 1934713408
        %v1238 = vunpack.c.0.s8 %v1237
        %v1239 = vperm.slane %v1231, %v1238
        %v1240 = vrot.slane %v1203, 4
        %v1241 = vsel %vm820, %v1240, %v1191
        %v1242 = vrot.slane %v1191, 4
        %v1243 = vsel %vm820, %v1203, %v1242
        %v1245 = vunpack.c.l.s4 1934713408
        %v1246 = vunpack.c.0.s8 %v1245
        %v1247 = vperm.slane %v1241, %v1246
        %v1249 = vunpack.c.l.s4 1934713408
        %v1250 = vunpack.c.0.s8 %v1249
        %v1251 = vperm.slane %v1243, %v1250
        %v1252 = vrot.slane %v1235, 4
        %v1253 = vsel %vm820, %v1252, %v1211
        %v1254 = vrot.slane %v1211, 4
        %v1255 = vsel %vm820, %v1235, %v1254
        %v1256 = vrot.slane %v1239, 4
        %v1257 = vsel %vm820, %v1256, %v1215
        %v1258 = vrot.slane %v1215, 4
        %v1259 = vsel %vm820, %v1239, %v1258
        %v1260 = vrot.slane %v1247, 4
        %v1261 = vsel %vm820, %v1260, %v1223
        %v1262 = vrot.slane %v1223, 4
        %v1263 = vsel %vm820, %v1247, %v1262
        %v1264 = vrot.slane %v1251, 4
        %v1265 = vsel %vm820, %v1264, %v1227
        %v1266 = vrot.slane %v1227, 4
        %v1267 = vsel %vm820, %v1251, %v1266
        %v1268 = vsel %vm820, %v982, %v963
        %v1270 = vunpack.c.l.s4 1983009808
        %v1271 = vunpack.c.0.s8 %v1270
        %v1272 = vperm.slane %v1268, %v1271
        %v1273 = vrot.slane %v983, 4
        %v1274 = vsel %vm820, %v1273, %v981
        %v1276 = vunpack.c.l.s4 1983009808
        %v1277 = vunpack.c.0.s8 %v1276
        %v1278 = vperm.slane %v1274, %v1277
        %v1279 = vsel %vm820, %v986, %v975
        %v1281 = vunpack.c.l.s4 1983009808
        %v1282 = vunpack.c.0.s8 %v1281
        %v1283 = vperm.slane %v1279, %v1282
        %v1284 = vrot.slane %v987, 4
        %v1285 = vsel %vm820, %v1284, %v985
        %v1287 = vunpack.c.l.s4 1983009808
        %v1288 = vunpack.c.0.s8 %v1287
        %v1289 = vperm.slane %v1285, %v1288
        %v1290 = vrot.slane %v1278, 4
        %v1291 = vsel %vm820, %v1290, %v1272
        %v1292 = vrot.slane %v1272, 4
        %v1293 = vsel %vm820, %v1278, %v1292
        %v1295 = vunpack.c.l.s4 1934713408
        %v1296 = vunpack.c.0.s8 %v1295
        %v1297 = vperm.slane %v1291, %v1296
        %v1299 = vunpack.c.l.s4 1934713408
        %v1300 = vunpack.c.0.s8 %v1299
        %v1301 = vperm.slane %v1293, %v1300
        %v1302 = vrot.slane %v1289, 4
        %v1303 = vsel %vm820, %v1302, %v1283
        %v1304 = vrot.slane %v1283, 4
        %v1305 = vsel %vm820, %v1289, %v1304
        %v1307 = vunpack.c.l.s4 1934713408
        %v1308 = vunpack.c.0.s8 %v1307
        %v1309 = vperm.slane %v1303, %v1308
        %v1311 = vunpack.c.l.s4 1934713408
        %v1312 = vunpack.c.0.s8 %v1311
        %v1313 = vperm.slane %v1305, %v1312
        %v1314 = vrot.slane %v1309, 4
        %v1315 = vsel %vm820, %v1314, %v1297
        %v1316 = vrot.slane %v1297, 4
        %v1317 = vsel %vm820, %v1309, %v1316
        %v1318 = vrot.slane %v1313, 4
        %v1319 = vsel %vm820, %v1318, %v1301
        %v1320 = vrot.slane %v1301, 4
        %v1321 = vsel %vm820, %v1313, %v1320
        %v1322 = vrot.slane %v1089, 4
        %v1323 = vsel %vm820, %v1322, %v1085
        %v1324 = vrot.slane %v1085, 4
        %v1325 = vsel %vm820, %v1089, %v1324
        %v1327 = vunpack.c.l.s4 1983009808
        %v1328 = vunpack.c.0.s8 %v1327
        %v1329 = vperm.slane %v1323, %v1328
        %v1331 = vunpack.c.l.s4 1983009808
        %v1332 = vunpack.c.0.s8 %v1331
        %v1333 = vperm.slane %v1325, %v1332
        %v1334 = vrot.slane %v1091, 4
        %v1335 = vsel %vm820, %v1334, %v1087
        %v1336 = vrot.slane %v1087, 4
        %v1337 = vsel %vm820, %v1091, %v1336
        %v1339 = vunpack.c.l.s4 1983009808
        %v1340 = vunpack.c.0.s8 %v1339
        %v1341 = vperm.slane %v1335, %v1340
        %v1343 = vunpack.c.l.s4 1983009808
        %v1344 = vunpack.c.0.s8 %v1343
        %v1345 = vperm.slane %v1337, %v1344
        %v1346 = vrot.slane %v1097, 4
        %v1347 = vsel %vm820, %v1346, %v1093
        %v1348 = vrot.slane %v1093, 4
        %v1349 = vsel %vm820, %v1097, %v1348
        %v1351 = vunpack.c.l.s4 1983009808
        %v1352 = vunpack.c.0.s8 %v1351
        %v1353 = vperm.slane %v1347, %v1352
        %v1355 = vunpack.c.l.s4 1983009808
        %v1356 = vunpack.c.0.s8 %v1355
        %v1357 = vperm.slane %v1349, %v1356
        %v1358 = vrot.slane %v1099, 4
        %v1359 = vsel %vm820, %v1358, %v1095
        %v1360 = vrot.slane %v1095, 4
        %v1361 = vsel %vm820, %v1099, %v1360
        %v1363 = vunpack.c.l.s4 1983009808
        %v1364 = vunpack.c.0.s8 %v1363
        %v1365 = vperm.slane %v1359, %v1364
        %v1367 = vunpack.c.l.s4 1983009808
        %v1368 = vunpack.c.0.s8 %v1367
        %v1369 = vperm.slane %v1361, %v1368
        %v1370 = vrot.slane %v1341, 4
        %v1371 = vsel %vm820, %v1370, %v1329
        %v1372 = vrot.slane %v1329, 4
        %v1373 = vsel %vm820, %v1341, %v1372
        %v1375 = vunpack.c.l.s4 1934713408
        %v1376 = vunpack.c.0.s8 %v1375
        %v1377 = vperm.slane %v1371, %v1376
        %v1379 = vunpack.c.l.s4 1934713408
        %v1380 = vunpack.c.0.s8 %v1379
        %v1381 = vperm.slane %v1373, %v1380
        %v1382 = vrot.slane %v1345, 4
        %v1383 = vsel %vm820, %v1382, %v1333
        %v1384 = vrot.slane %v1333, 4
        %v1385 = vsel %vm820, %v1345, %v1384
        %v1387 = vunpack.c.l.s4 1934713408
        %v1388 = vunpack.c.0.s8 %v1387
        %v1389 = vperm.slane %v1383, %v1388
        %v1391 = vunpack.c.l.s4 1934713408
        %v1392 = vunpack.c.0.s8 %v1391
        %v1393 = vperm.slane %v1385, %v1392
        %v1394 = vrot.slane %v1365, 4
        %v1395 = vsel %vm820, %v1394, %v1353
        %v1396 = vrot.slane %v1353, 4
        %v1397 = vsel %vm820, %v1365, %v1396
        %v1399 = vunpack.c.l.s4 1934713408
        %v1400 = vunpack.c.0.s8 %v1399
        %v1401 = vperm.slane %v1395, %v1400
        %v1403 = vunpack.c.l.s4 1934713408
        %v1404 = vunpack.c.0.s8 %v1403
        %v1405 = vperm.slane %v1397, %v1404
        %v1406 = vrot.slane %v1369, 4
        %v1407 = vsel %vm820, %v1406, %v1357
        %v1408 = vrot.slane %v1357, 4
        %v1409 = vsel %vm820, %v1369, %v1408
        %v1411 = vunpack.c.l.s4 1934713408
        %v1412 = vunpack.c.0.s8 %v1411
        %v1413 = vperm.slane %v1407, %v1412
        %v1415 = vunpack.c.l.s4 1934713408
        %v1416 = vunpack.c.0.s8 %v1415
        %v1417 = vperm.slane %v1409, %v1416
        %v1418 = vrot.slane %v1401, 4
        %v1419 = vsel %vm820, %v1418, %v1377
        %v1420 = vrot.slane %v1377, 4
        %v1421 = vsel %vm820, %v1401, %v1420
        %v1422 = vrot.slane %v1405, 4
        %v1423 = vsel %vm820, %v1422, %v1381
        %v1424 = vrot.slane %v1381, 4
        %v1425 = vsel %vm820, %v1405, %v1424
        %v1426 = vrot.slane %v1413, 4
        %v1427 = vsel %vm820, %v1426, %v1389
        %v1428 = vrot.slane %v1389, 4
        %v1429 = vsel %vm820, %v1413, %v1428
        %v1430 = vrot.slane %v1417, 4
        %v1431 = vsel %vm820, %v1430, %v1393
        %v1432 = vrot.slane %v1393, 4
        %v1433 = vsel %vm820, %v1417, %v1432
        %v1434 = vsel %vm820, %v1150, %v1131
        %v1436 = vunpack.c.l.s4 1983009808
        %v1437 = vunpack.c.0.s8 %v1436
        %v1438 = vperm.slane %v1434, %v1437
        %v1439 = vrot.slane %v1151, 4
        %v1440 = vsel %vm820, %v1439, %v1149
        %v1442 = vunpack.c.l.s4 1983009808
        %v1443 = vunpack.c.0.s8 %v1442
        %v1444 = vperm.slane %v1440, %v1443
        %v1445 = vsel %vm820, %v1154, %v1143
        %v1447 = vunpack.c.l.s4 1983009808
        %v1448 = vunpack.c.0.s8 %v1447
        %v1449 = vperm.slane %v1445, %v1448
        %v1450 = vrot.slane %v1155, 4
        %v1451 = vsel %vm820, %v1450, %v1153
        %v1453 = vunpack.c.l.s4 1983009808
        %v1454 = vunpack.c.0.s8 %v1453
        %v1455 = vperm.slane %v1451, %v1454
        %v1456 = vrot.slane %v1444, 4
        %v1457 = vsel %vm820, %v1456, %v1438
        %v1458 = vrot.slane %v1438, 4
        %v1459 = vsel %vm820, %v1444, %v1458
        %v1461 = vunpack.c.l.s4 1934713408
        %v1462 = vunpack.c.0.s8 %v1461
        %v1463 = vperm.slane %v1457, %v1462
        %v1465 = vunpack.c.l.s4 1934713408
        %v1466 = vunpack.c.0.s8 %v1465
        %v1467 = vperm.slane %v1459, %v1466
        %v1468 = vrot.slane %v1455, 4
        %v1469 = vsel %vm820, %v1468, %v1449
        %v1470 = vrot.slane %v1449, 4
        %v1471 = vsel %vm820, %v1455, %v1470
        %v1473 = vunpack.c.l.s4 1934713408
        %v1474 = vunpack.c.0.s8 %v1473
        %v1475 = vperm.slane %v1469, %v1474
        %v1477 = vunpack.c.l.s4 1934713408
        %v1478 = vunpack.c.0.s8 %v1477
        %v1479 = vperm.slane %v1471, %v1478
        %v1480 = vrot.slane %v1475, 4
        %v1481 = vsel %vm820, %v1480, %v1463
        %v1482 = vrot.slane %v1463, 4
        %v1483 = vsel %vm820, %v1475, %v1482
        %v1484 = vrot.slane %v1479, 4
        %v1485 = vsel %vm820, %v1484, %v1467
        %v1486 = vrot.slane %v1467, 4
        %v1487 = vsel %vm820, %v1479, %v1486
        %v1488 = vpack.c.bf16 %v1253, %v1253
        %v1489 = vpack.c.bf16 %v1255, %v1255
        %v1490 = vpack.c.bf16 %v1257, %v1257
        %v1491 = vpack.c.bf16 %v1259, %v1259
        %v1492 = vpack.c.bf16 %v1419, %v1419
        %v1493 = vpack.c.bf16 %v1421, %v1421
        %v1494 = vpack.c.bf16 %v1423, %v1423
        %v1495 = vpack.c.bf16 %v1425, %v1425
        %v1496 = vpack.c.bf16 %v1261, %v1261
        %v1497 = vpack.c.bf16 %v1263, %v1263
        %v1498 = vpack.c.bf16 %v1265, %v1265
        %v1499 = vpack.c.bf16 %v1267, %v1267
        %v1500 = vpack.c.bf16 %v1427, %v1427
        %v1501 = vpack.c.bf16 %v1429, %v1429
        %v1502 = vpack.c.bf16 %v1431, %v1431
        %v1503 = vpack.c.bf16 %v1433, %v1433
        %vm1504 = vcmask 64512
        %v1506 = vsel %vm1504, %v1488, 0
        %v1509 = vsel %vm1504, %v1496, 0
        %1511 = vmatpush.bf16.xpose.msra.mxu0 0
        %1512 = vmatpush.bf16.xpose.msra.mxu0 0
        %1513 = vmatpush.bf16.xpose.msra.mxu0 0
        %1514 = vmatpush.bf16.xpose.msra.mxu0 0
        %1515 = vmatpush.bf16.xpose.msra.mxu0 0
        %1516 = vmatpush.bf16.xpose.msra.mxu0 0
        %1517 = vmatpush.bf16.xpose.msra.mxu0 0
        %1518 = vmatpush.bf16.xpose.msra.mxu0 %v1509
        %1519 = vmatmul.bf16.gmra.mxu0 %v1506
        %v1520 = vpop.f32.mrf.mxu0
        %v1521 = vadd.f32 0.0, %v1520
        %v1522 = vpop.f32.mrf.mxu0
        %1523 = vdwg.mxu0
        %v1525 = vsel %vm1504, %v1489, 0
        %v1528 = vsel %vm1504, %v1497, 0
        %1530 = vmatpush.bf16.xpose.msra.mxu0 0
        %1531 = vmatpush.bf16.xpose.msra.mxu0 0
        %1532 = vmatpush.bf16.xpose.msra.mxu0 0
        %1533 = vmatpush.bf16.xpose.msra.mxu0 0
        %1534 = vmatpush.bf16.xpose.msra.mxu0 0
        %1535 = vmatpush.bf16.xpose.msra.mxu0 0
        %1536 = vmatpush.bf16.xpose.msra.mxu0 0
        %1537 = vmatpush.bf16.xpose.msra.mxu0 %v1528
        %1538 = vmatmul.bf16.gmra.mxu0 %v1525
        %v1539 = vpop.f32.mrf.mxu0
        %v1540 = vadd.f32 0.0, %v1539
        %v1541 = vpop.f32.mrf.mxu0
        %1542 = vdwg.mxu0
        %v1544 = vsel %vm1504, %v1490, 0
        %v1547 = vsel %vm1504, %v1498, 0
        %1549 = vmatpush.bf16.xpose.msra.mxu0 0
        %1550 = vmatpush.bf16.xpose.msra.mxu0 0
        %1551 = vmatpush.bf16.xpose.msra.mxu0 0
        %1552 = vmatpush.bf16.xpose.msra.mxu0 0
        %1553 = vmatpush.bf16.xpose.msra.mxu0 0
        %1554 = vmatpush.bf16.xpose.msra.mxu0 0
        %1555 = vmatpush.bf16.xpose.msra.mxu0 0
        %1556 = vmatpush.bf16.xpose.msra.mxu0 %v1547
        %1557 = vmatmul.bf16.gmra.mxu0 %v1544
        %v1558 = vpop.f32.mrf.mxu0
        %v1559 = vadd.f32 0.0, %v1558
        %v1560 = vpop.f32.mrf.mxu0
        %1561 = vdwg.mxu0
        %v1563 = vsel %vm1504, %v1491, 0
        %v1566 = vsel %vm1504, %v1499, 0
        %1568 = vmatpush.bf16.xpose.msra.mxu0 0
        %1569 = vmatpush.bf16.xpose.msra.mxu0 0
        %1570 = vmatpush.bf16.xpose.msra.mxu0 0
        %1571 = vmatpush.bf16.xpose.msra.mxu0 0
        %1572 = vmatpush.bf16.xpose.msra.mxu0 0
        %1573 = vmatpush.bf16.xpose.msra.mxu0 0
        %1574 = vmatpush.bf16.xpose.msra.mxu0 0
        %1575 = vmatpush.bf16.xpose.msra.mxu0 %v1566
        %1576 = vmatmul.bf16.gmra.mxu0 %v1563
        %v1577 = vpop.f32.mrf.mxu0
        %v1578 = vadd.f32 0.0, %v1577
        %v1579 = vpop.f32.mrf.mxu0
        %1580 = vdwg.mxu0
        %v1582 = vsel %vm1504, %v1492, 0
        %v1585 = vsel %vm1504, %v1500, 0
        %1587 = vmatpush.bf16.xpose.msra.mxu0 0
        %1588 = vmatpush.bf16.xpose.msra.mxu0 0
        %1589 = vmatpush.bf16.xpose.msra.mxu0 0
        %1590 = vmatpush.bf16.xpose.msra.mxu0 0
        %1591 = vmatpush.bf16.xpose.msra.mxu0 0
        %1592 = vmatpush.bf16.xpose.msra.mxu0 0
        %1593 = vmatpush.bf16.xpose.msra.mxu0 0
        %1594 = vmatpush.bf16.xpose.msra.mxu0 %v1585
        %1595 = vmatmul.bf16.gmra.mxu0 %v1582
        %v1596 = vpop.f32.mrf.mxu0
        %v1597 = vadd.f32 0.0, %v1596
        %v1598 = vpop.f32.mrf.mxu0
        %1599 = vdwg.mxu0
        %v1601 = vsel %vm1504, %v1493, 0
        %v1604 = vsel %vm1504, %v1501, 0
        %1606 = vmatpush.bf16.xpose.msra.mxu0 0
        %1607 = vmatpush.bf16.xpose.msra.mxu0 0
        %1608 = vmatpush.bf16.xpose.msra.mxu0 0
        %1609 = vmatpush.bf16.xpose.msra.mxu0 0
        %1610 = vmatpush.bf16.xpose.msra.mxu0 0
        %1611 = vmatpush.bf16.xpose.msra.mxu0 0
        %1612 = vmatpush.bf16.xpose.msra.mxu0 0
        %1613 = vmatpush.bf16.xpose.msra.mxu0 %v1604
        %1614 = vmatmul.bf16.gmra.mxu0 %v1601
        %v1615 = vpop.f32.mrf.mxu0
        %v1616 = vadd.f32 0.0, %v1615
        %v1617 = vpop.f32.mrf.mxu0
        %1618 = vdwg.mxu0
        %v1620 = vsel %vm1504, %v1494, 0
        %v1623 = vsel %vm1504, %v1502, 0
        %1625 = vmatpush.bf16.xpose.msra.mxu0 0
        %1626 = vmatpush.bf16.xpose.msra.mxu0 0
        %1627 = vmatpush.bf16.xpose.msra.mxu0 0
        %1628 = vmatpush.bf16.xpose.msra.mxu0 0
        %1629 = vmatpush.bf16.xpose.msra.mxu0 0
        %1630 = vmatpush.bf16.xpose.msra.mxu0 0
        %1631 = vmatpush.bf16.xpose.msra.mxu0 0
        %1632 = vmatpush.bf16.xpose.msra.mxu0 %v1623
        %1633 = vmatmul.bf16.gmra.mxu0 %v1620
        %v1634 = vpop.f32.mrf.mxu0
        %v1635 = vadd.f32 0.0, %v1634
        %v1636 = vpop.f32.mrf.mxu0
        %1637 = vdwg.mxu0
        %v1639 = vsel %vm1504, %v1495, 0
        %v1642 = vsel %vm1504, %v1503, 0
        %1644 = vmatpush.bf16.xpose.msra.mxu0 0
        %1645 = vmatpush.bf16.xpose.msra.mxu0 0
        %1646 = vmatpush.bf16.xpose.msra.mxu0 0
        %1647 = vmatpush.bf16.xpose.msra.mxu0 0
        %1648 = vmatpush.bf16.xpose.msra.mxu0 0
        %1649 = vmatpush.bf16.xpose.msra.mxu0 0
        %1650 = vmatpush.bf16.xpose.msra.mxu0 0
        %1651 = vmatpush.bf16.xpose.msra.mxu0 %v1642
        %1652 = vmatmul.bf16.gmra.mxu0 %v1639
        %v1653 = vpop.f32.mrf.mxu0
        %v1654 = vadd.f32 0.0, %v1653
        %v1655 = vpop.f32.mrf.mxu0
        %1656 = vdwg.mxu0
        %v1657 = vsel %vm1504, %v1521, -inf
        %1658 = vmax.xlane.f32.xlu0 %v1657
        %v1659 = vpop.xlane.xlu0 %1658
        %v1660 = vsel %vm1504, %v1540, -inf
        %1661 = vmax.xlane.f32.xlu0 %v1660
        %v1662 = vpop.xlane.xlu0 %1661
        %v1663 = vsel %vm1504, %v1559, -inf
        %1664 = vmax.xlane.f32.xlu0 %v1663
        %v1665 = vpop.xlane.xlu0 %1664
        %v1666 = vsel %vm1504, %v1578, -inf
        %1667 = vmax.xlane.f32.xlu0 %v1666
        %v1668 = vpop.xlane.xlu0 %1667
        %v1669 = vsel %vm1504, %v1597, -inf
        %1670 = vmax.xlane.f32.xlu0 %v1669
        %v1671 = vpop.xlane.xlu0 %1670
        %v1672 = vsel %vm1504, %v1616, -inf
        %1673 = vmax.xlane.f32.xlu0 %v1672
        %v1674 = vpop.xlane.xlu0 %1673
        %v1675 = vsel %vm1504, %v1635, -inf
        %1676 = vmax.xlane.f32.xlu0 %v1675
        %v1677 = vpop.xlane.xlu0 %1676
        %v1678 = vsel %vm1504, %v1654, -inf
        %1679 = vmax.xlane.f32.xlu0 %v1678
        %v1680 = vpop.xlane.xlu0 %1679
        %v1681 = vsub.f32 %v1521, %v1659
        %v1682 = vsub.f32 %v1540, %v1662
        %v1683 = vsub.f32 %v1559, %v1665
        %v1684 = vsub.f32 %v1578, %v1668
        %v1685 = vsub.f32 %v1597, %v1671
        %v1686 = vsub.f32 %v1616, %v1674
        %v1687 = vsub.f32 %v1635, %v1677
        %v1688 = vsub.f32 %v1654, %v1680
        %v1689 = vmul.f32 %v1681, 1.442695
        %v1690 = vpow.pop %v1689
        %v1691 = vmul.f32 %v1682, 1.442695
        %v1692 = vpow.pop %v1691
        %v1693 = vmul.f32 %v1683, 1.442695
        %v1694 = vpow.pop %v1693
        %v1695 = vmul.f32 %v1684, 1.442695
        %v1696 = vpow.pop %v1695
        %v1697 = vmul.f32 %v1685, 1.442695
        %v1698 = vpow.pop %v1697
        %v1699 = vmul.f32 %v1686, 1.442695
        %v1700 = vpow.pop %v1699
        %v1701 = vmul.f32 %v1687, 1.442695
        %v1702 = vpow.pop %v1701
        %v1703 = vmul.f32 %v1688, 1.442695
        %v1704 = vpow.pop %v1703
        %v1705 = vsel %vm1504, %v1690, 0.0
        %1706 = vadd.xlane.f32.xlu0 %v1705
        %v1707 = vpop.xlane.xlu0 %1706
        %v1708 = vsel %vm1504, %v1692, 0.0
        %1709 = vadd.xlane.f32.xlu0 %v1708
        %v1710 = vpop.xlane.xlu0 %1709
        %v1711 = vsel %vm1504, %v1694, 0.0
        %1712 = vadd.xlane.f32.xlu0 %v1711
        %v1713 = vpop.xlane.xlu0 %1712
        %v1714 = vsel %vm1504, %v1696, 0.0
        %1715 = vadd.xlane.f32.xlu0 %v1714
        %v1716 = vpop.xlane.xlu0 %1715
        %v1717 = vsel %vm1504, %v1698, 0.0
        %1718 = vadd.xlane.f32.xlu0 %v1717
        %v1719 = vpop.xlane.xlu0 %1718
        %v1720 = vsel %vm1504, %v1700, 0.0
        %1721 = vadd.xlane.f32.xlu0 %v1720
        %v1722 = vpop.xlane.xlu0 %1721
        %v1723 = vsel %vm1504, %v1702, 0.0
        %1724 = vadd.xlane.f32.xlu0 %v1723
        %v1725 = vpop.xlane.xlu0 %1724
        %v1726 = vsel %vm1504, %v1704, 0.0
        %1727 = vadd.xlane.f32.xlu0 %v1726
        %v1728 = vpop.xlane.xlu0 %1727
        %v1729 = vrcp.pop %v1707
        %v1730 = vrcp.pop %v1710
        %v1731 = vrcp.pop %v1713
        %v1732 = vrcp.pop %v1716
        %v1733 = vrcp.pop %v1719
        %v1734 = vrcp.pop %v1722
        %v1735 = vrcp.pop %v1725
        %v1736 = vrcp.pop %v1728
        %v1737 = vmul.f32 %v1690, %v1729
        %v1738 = vmul.f32 %v1692, %v1730
        %v1739 = vmul.f32 %v1694, %v1731
        %v1740 = vmul.f32 %v1696, %v1732
        %v1741 = vmul.f32 %v1698, %v1733
        %v1742 = vmul.f32 %v1700, %v1734
        %v1743 = vmul.f32 %v1702, %v1735
        %v1744 = vmul.f32 %v1704, %v1736
        %v1745 = vpack.c.bf16 %v1737, %v1737
        %v1746 = vpack.c.bf16 %v1738, %v1738
        %v1747 = vpack.c.bf16 %v1739, %v1739
        %v1748 = vpack.c.bf16 %v1740, %v1740
        %v1749 = vpack.c.bf16 %v1741, %v1741
        %v1750 = vpack.c.bf16 %v1742, %v1742
        %v1751 = vpack.c.bf16 %v1743, %v1743
        %v1752 = vpack.c.bf16 %v1744, %v1744
        %v1753 = vpack.c.bf16 %v1315, %v1315
        %v1754 = vpack.c.bf16 %v1317, %v1317
        %v1755 = vpack.c.bf16 %v1319, %v1319
        %v1756 = vpack.c.bf16 %v1321, %v1321
        %v1757 = vpack.c.bf16 %v1481, %v1481
        %v1758 = vpack.c.bf16 %v1483, %v1483
        %v1759 = vpack.c.bf16 %v1485, %v1485
        %v1760 = vpack.c.bf16 %v1487, %v1487
        %v1762 = vsel %vm1504, %v1745, 0
        %vm1764 = vcmask 1043456
        %v1766 = vsel %vm1764, %v1753, 0
        %1768 = vmatpush.bf16.msra.mxu0 0
        %1769 = vmatpush.bf16.msra.mxu0 0
        %1770 = vmatpush.bf16.msra.mxu0 0
        %1771 = vmatpush.bf16.msra.mxu0 0
        %1772 = vmatpush.bf16.msra.mxu0 0
        %1773 = vmatpush.bf16.msra.mxu0 0
        %1774 = vmatpush.bf16.msra.mxu0 0
        %1775 = vmatpush.bf16.msra.mxu0 %v1766
        %1776 = vmatmul.bf16.gmra.mxu0 %v1762
        %v1777 = vpop.f32.mrf.mxu0
        %v1778 = vadd.f32 0.0, %v1777
        %v1779 = vpop.f32.mrf.mxu0
        %1780 = vdwg.mxu0
        %v1782 = vsel %vm1504, %v1746, 0
        %v1785 = vsel %vm1764, %v1754, 0
        %1787 = vmatpush.bf16.msra.mxu0 0
        %1788 = vmatpush.bf16.msra.mxu0 0
        %1789 = vmatpush.bf16.msra.mxu0 0
        %1790 = vmatpush.bf16.msra.mxu0 0
        %1791 = vmatpush.bf16.msra.mxu0 0
        %1792 = vmatpush.bf16.msra.mxu0 0
        %1793 = vmatpush.bf16.msra.mxu0 0
        %1794 = vmatpush.bf16.msra.mxu0 %v1785
        %1795 = vmatmul.bf16.gmra.mxu0 %v1782
        %v1796 = vpop.f32.mrf.mxu0
        %v1797 = vadd.f32 0.0, %v1796
        %v1798 = vpop.f32.mrf.mxu0
        %1799 = vdwg.mxu0
        %v1801 = vsel %vm1504, %v1747, 0
        %v1804 = vsel %vm1764, %v1755, 0
        %1806 = vmatpush.bf16.msra.mxu0 0
        %1807 = vmatpush.bf16.msra.mxu0 0
        %1808 = vmatpush.bf16.msra.mxu0 0
        %1809 = vmatpush.bf16.msra.mxu0 0
        %1810 = vmatpush.bf16.msra.mxu0 0
        %1811 = vmatpush.bf16.msra.mxu0 0
        %1812 = vmatpush.bf16.msra.mxu0 0
        %1813 = vmatpush.bf16.msra.mxu0 %v1804
        %1814 = vmatmul.bf16.gmra.mxu0 %v1801
        %v1815 = vpop.f32.mrf.mxu0
        %v1816 = vadd.f32 0.0, %v1815
        %v1817 = vpop.f32.mrf.mxu0
        %1818 = vdwg.mxu0
        %v1820 = vsel %vm1504, %v1748, 0
        %v1823 = vsel %vm1764, %v1756, 0
        %1825 = vmatpush.bf16.msra.mxu0 0
        %1826 = vmatpush.bf16.msra.mxu0 0
        %1827 = vmatpush.bf16.msra.mxu0 0
        %1828 = vmatpush.bf16.msra.mxu0 0
        %1829 = vmatpush.bf16.msra.mxu0 0
        %1830 = vmatpush.bf16.msra.mxu0 0
        %1831 = vmatpush.bf16.msra.mxu0 0
        %1832 = vmatpush.bf16.msra.mxu0 %v1823
        %1833 = vmatmul.bf16.gmra.mxu0 %v1820
        %v1834 = vpop.f32.mrf.mxu0
        %v1835 = vadd.f32 0.0, %v1834
        %v1836 = vpop.f32.mrf.mxu0
        %1837 = vdwg.mxu0
        %v1839 = vsel %vm1504, %v1749, 0
        %v1842 = vsel %vm1764, %v1757, 0
        %1844 = vmatpush.bf16.msra.mxu0 0
        %1845 = vmatpush.bf16.msra.mxu0 0
        %1846 = vmatpush.bf16.msra.mxu0 0
        %1847 = vmatpush.bf16.msra.mxu0 0
        %1848 = vmatpush.bf16.msra.mxu0 0
        %1849 = vmatpush.bf16.msra.mxu0 0
        %1850 = vmatpush.bf16.msra.mxu0 0
        %1851 = vmatpush.bf16.msra.mxu0 %v1842
        %1852 = vmatmul.bf16.gmra.mxu0 %v1839
        %v1853 = vpop.f32.mrf.mxu0
        %v1854 = vadd.f32 0.0, %v1853
        %v1855 = vpop.f32.mrf.mxu0
        %1856 = vdwg.mxu0
        %v1858 = vsel %vm1504, %v1750, 0
        %v1861 = vsel %vm1764, %v1758, 0
        %1863 = vmatpush.bf16.msra.mxu0 0
        %1864 = vmatpush.bf16.msra.mxu0 0
        %1865 = vmatpush.bf16.msra.mxu0 0
        %1866 = vmatpush.bf16.msra.mxu0 0
        %1867 = vmatpush.bf16.msra.mxu0 0
        %1868 = vmatpush.bf16.msra.mxu0 0
        %1869 = vmatpush.bf16.msra.mxu0 0
        %1870 = vmatpush.bf16.msra.mxu0 %v1861
        %1871 = vmatmul.bf16.gmra.mxu0 %v1858
        %v1872 = vpop.f32.mrf.mxu0
        %v1873 = vadd.f32 0.0, %v1872
        %v1874 = vpop.f32.mrf.mxu0
        %1875 = vdwg.mxu0
        %v1877 = vsel %vm1504, %v1751, 0
        %v1880 = vsel %vm1764, %v1759, 0
        %1882 = vmatpush.bf16.msra.mxu0 0
        %1883 = vmatpush.bf16.msra.mxu0 0
        %1884 = vmatpush.bf16.msra.mxu0 0
        %1885 = vmatpush.bf16.msra.mxu0 0
        %1886 = vmatpush.bf16.msra.mxu0 0
        %1887 = vmatpush.bf16.msra.mxu0 0
        %1888 = vmatpush.bf16.msra.mxu0 0
        %1889 = vmatpush.bf16.msra.mxu0 %v1880
        %1890 = vmatmul.bf16.gmra.mxu0 %v1877
        %v1891 = vpop.f32.mrf.mxu0
        %v1892 = vadd.f32 0.0, %v1891
        %v1893 = vpop.f32.mrf.mxu0
        %1894 = vdwg.mxu0
        %v1896 = vsel %vm1504, %v1752, 0
        %v1899 = vsel %vm1764, %v1760, 0
        %1901 = vmatpush.bf16.msra.mxu0 0
        %1902 = vmatpush.bf16.msra.mxu0 0
        %1903 = vmatpush.bf16.msra.mxu0 0
        %1904 = vmatpush.bf16.msra.mxu0 0
        %1905 = vmatpush.bf16.msra.mxu0 0
        %1906 = vmatpush.bf16.msra.mxu0 0
        %1907 = vmatpush.bf16.msra.mxu0 0
        %1908 = vmatpush.bf16.msra.mxu0 %v1899
        %1909 = vmatmul.bf16.gmra.mxu0 %v1896
        %v1910 = vpop.f32.mrf.mxu0
        %v1911 = vadd.f32 0.0, %v1910
        %v1912 = vpop.f32.mrf.mxu0
        %1913 = vdwg.mxu0
        %v1914 = vrot.slane %v1816, 4
        %v1915 = vsel %vm820, %v1914, %v1778
        %v1916 = vrot.slane %v1778, 4
        %v1917 = vsel %vm820, %v1816, %v1916
        %v1919 = vunpack.c.l.s4 1983009808
        %v1920 = vunpack.c.0.s8 %v1919
        %v1921 = vperm.slane %v1915, %v1920
        %v1923 = vunpack.c.l.s4 1983009808
        %v1924 = vunpack.c.0.s8 %v1923
        %v1925 = vperm.slane %v1917, %v1924
        %v1926 = vrot.slane %v1835, 4
        %v1927 = vsel %vm820, %v1926, %v1797
        %v1928 = vrot.slane %v1797, 4
        %v1929 = vsel %vm820, %v1835, %v1928
        %v1931 = vunpack.c.l.s4 1983009808
        %v1932 = vunpack.c.0.s8 %v1931
        %v1933 = vperm.slane %v1927, %v1932
        %v1935 = vunpack.c.l.s4 1983009808
        %v1936 = vunpack.c.0.s8 %v1935
        %v1937 = vperm.slane %v1929, %v1936
        %v1938 = vrot.slane %v1933, 4
        %v1939 = vsel %vm820, %v1938, %v1921
        %v1940 = vrot.slane %v1921, 4
        %v1941 = vsel %vm820, %v1933, %v1940
        %v1943 = vunpack.c.l.s4 1934713408
        %v1944 = vunpack.c.0.s8 %v1943
        %v1945 = vperm.slane %v1939, %v1944
        %v1947 = vunpack.c.l.s4 1934713408
        %v1948 = vunpack.c.0.s8 %v1947
        %v1949 = vperm.slane %v1941, %v1948
        %v1950 = vrot.slane %v1937, 4
        %v1951 = vsel %vm820, %v1950, %v1925
        %v1952 = vrot.slane %v1925, 4
        %v1953 = vsel %vm820, %v1937, %v1952
        %v1955 = vunpack.c.l.s4 1934713408
        %v1956 = vunpack.c.0.s8 %v1955
        %v1957 = vperm.slane %v1951, %v1956
        %v1959 = vunpack.c.l.s4 1934713408
        %v1960 = vunpack.c.0.s8 %v1959
        %v1961 = vperm.slane %v1953, %v1960
        %v1962 = vrot.slane %v1945, 4
        %v1963 = vsel %vm820, 0.0, %v1962
        %v1964 = vrot.slane %v1949, 4
        %v1965 = vsel %vm820, 0.0, %v1964
        %v1966 = vrot.slane %v1957, 4
        %v1967 = vsel %vm820, 0.0, %v1966
        %v1968 = vrot.slane %v1961, 4
        %v1969 = vsel %vm820, 0.0, %v1968
        %v1970 = vrot.slane %v1892, 4
        %v1971 = vsel %vm820, %v1970, %v1854
        %v1972 = vrot.slane %v1854, 4
        %v1973 = vsel %vm820, %v1892, %v1972
        %v1975 = vunpack.c.l.s4 1983009808
        %v1976 = vunpack.c.0.s8 %v1975
        %v1977 = vperm.slane %v1971, %v1976
        %v1979 = vunpack.c.l.s4 1983009808
        %v1980 = vunpack.c.0.s8 %v1979
        %v1981 = vperm.slane %v1973, %v1980
        %v1982 = vrot.slane %v1911, 4
        %v1983 = vsel %vm820, %v1982, %v1873
        %v1984 = vrot.slane %v1873, 4
        %v1985 = vsel %vm820, %v1911, %v1984
        %v1987 = vunpack.c.l.s4 1983009808
        %v1988 = vunpack.c.0.s8 %v1987
        %v1989 = vperm.slane %v1983, %v1988
        %v1991 = vunpack.c.l.s4 1983009808
        %v1992 = vunpack.c.0.s8 %v1991
        %v1993 = vperm.slane %v1985, %v1992
        %v1994 = vrot.slane %v1989, 4
        %v1995 = vsel %vm820, %v1994, %v1977
        %v1996 = vrot.slane %v1977, 4
        %v1997 = vsel %vm820, %v1989, %v1996
        %v1999 = vunpack.c.l.s4 1934713408
        %v2000 = vunpack.c.0.s8 %v1999
        %v2001 = vperm.slane %v1995, %v2000
        %v2003 = vunpack.c.l.s4 1934713408
        %v2004 = vunpack.c.0.s8 %v2003
        %v2005 = vperm.slane %v1997, %v2004
        %v2006 = vrot.slane %v1993, 4
        %v2007 = vsel %vm820, %v2006, %v1981
        %v2008 = vrot.slane %v1981, 4
        %v2009 = vsel %vm820, %v1993, %v2008
        %v2011 = vunpack.c.l.s4 1934713408
        %v2012 = vunpack.c.0.s8 %v2011
        %v2013 = vperm.slane %v2007, %v2012
        %v2015 = vunpack.c.l.s4 1934713408
        %v2016 = vunpack.c.0.s8 %v2015
        %v2017 = vperm.slane %v2009, %v2016
        %v2018 = vrot.slane %v2001, 4
        %v2019 = vsel %vm820, 0.0, %v2018
        %v2020 = vrot.slane %v2005, 4
        %v2021 = vsel %vm820, 0.0, %v2020
        %v2022 = vrot.slane %v2013, 4
        %v2023 = vsel %vm820, 0.0, %v2022
        %v2024 = vrot.slane %v2017, 4
        %v2025 = vsel %vm820, 0.0, %v2024
        %v2026 = vsel %vm820, %v1964, %v1945
        %v2028 = vunpack.c.l.s4 1983009808
        %v2029 = vunpack.c.0.s8 %v2028
        %v2030 = vperm.slane %v2026, %v2029
        %v2031 = vrot.slane %v1965, 4
        %v2032 = vsel %vm820, %v2031, %v1963
        %v2034 = vunpack.c.l.s4 1983009808
        %v2035 = vunpack.c.0.s8 %v2034
        %v2036 = vperm.slane %v2032, %v2035
        %v2037 = vsel %vm820, %v1968, %v1957
        %v2039 = vunpack.c.l.s4 1983009808
        %v2040 = vunpack.c.0.s8 %v2039
        %v2041 = vperm.slane %v2037, %v2040
        %v2042 = vrot.slane %v1969, 4
        %v2043 = vsel %vm820, %v2042, %v1967
        %v2045 = vunpack.c.l.s4 1983009808
        %v2046 = vunpack.c.0.s8 %v2045
        %v2047 = vperm.slane %v2043, %v2046
        %v2048 = vrot.slane %v2036, 4
        %v2049 = vsel %vm820, %v2048, %v2030
        %v2050 = vrot.slane %v2030, 4
        %v2051 = vsel %vm820, %v2036, %v2050
        %v2053 = vunpack.c.l.s4 1934713408
        %v2054 = vunpack.c.0.s8 %v2053
        %v2055 = vperm.slane %v2049, %v2054
        %v2057 = vunpack.c.l.s4 1934713408
        %v2058 = vunpack.c.0.s8 %v2057
        %v2059 = vperm.slane %v2051, %v2058
        %v2060 = vrot.slane %v2047, 4
        %v2061 = vsel %vm820, %v2060, %v2041
        %v2062 = vrot.slane %v2041, 4
        %v2063 = vsel %vm820, %v2047, %v2062
        %v2065 = vunpack.c.l.s4 1934713408
        %v2066 = vunpack.c.0.s8 %v2065
        %v2067 = vperm.slane %v2061, %v2066
        %v2069 = vunpack.c.l.s4 1934713408
        %v2070 = vunpack.c.0.s8 %v2069
        %v2071 = vperm.slane %v2063, %v2070
        %v2072 = vrot.slane %v2067, 4
        %v2073 = vsel %vm820, %v2072, %v2055
        %v2074 = vrot.slane %v2055, 4
        %v2075 = vsel %vm820, %v2067, %v2074
        %v2076 = vrot.slane %v2071, 4
        %v2077 = vsel %vm820, %v2076, %v2059
        %v2078 = vrot.slane %v2059, 4
        %v2079 = vsel %vm820, %v2071, %v2078
        %v2080 = vsel %vm820, %v2020, %v2001
        %v2082 = vunpack.c.l.s4 1983009808
        %v2083 = vunpack.c.0.s8 %v2082
        %v2084 = vperm.slane %v2080, %v2083
        %v2085 = vrot.slane %v2021, 4
        %v2086 = vsel %vm820, %v2085, %v2019
        %v2088 = vunpack.c.l.s4 1983009808
        %v2089 = vunpack.c.0.s8 %v2088
        %v2090 = vperm.slane %v2086, %v2089
        %v2091 = vsel %vm820, %v2024, %v2013
        %v2093 = vunpack.c.l.s4 1983009808
        %v2094 = vunpack.c.0.s8 %v2093
        %v2095 = vperm.slane %v2091, %v2094
        %v2096 = vrot.slane %v2025, 4
        %v2097 = vsel %vm820, %v2096, %v2023
        %v2099 = vunpack.c.l.s4 1983009808
        %v2100 = vunpack.c.0.s8 %v2099
        %v2101 = vperm.slane %v2097, %v2100
        %v2102 = vrot.slane %v2090, 4
        %v2103 = vsel %vm820, %v2102, %v2084
        %v2104 = vrot.slane %v2084, 4
        %v2105 = vsel %vm820, %v2090, %v2104
        %v2107 = vunpack.c.l.s4 1934713408
        %v2108 = vunpack.c.0.s8 %v2107
        %v2109 = vperm.slane %v2103, %v2108
        %v2111 = vunpack.c.l.s4 1934713408
        %v2112 = vunpack.c.0.s8 %v2111
        %v2113 = vperm.slane %v2105, %v2112
        %v2114 = vrot.slane %v2101, 4
        %v2115 = vsel %vm820, %v2114, %v2095
        %v2116 = vrot.slane %v2095, 4
        %v2117 = vsel %vm820, %v2101, %v2116
        %v2119 = vunpack.c.l.s4 1934713408
        %v2120 = vunpack.c.0.s8 %v2119
        %v2121 = vperm.slane %v2115, %v2120
        %v2123 = vunpack.c.l.s4 1934713408
        %v2124 = vunpack.c.0.s8 %v2123
        %v2125 = vperm.slane %v2117, %v2124
        %v2126 = vrot.slane %v2121, 4
        %v2127 = vsel %vm820, %v2126, %v2109
        %v2128 = vrot.slane %v2109, 4
        %v2129 = vsel %vm820, %v2121, %v2128
        %v2130 = vrot.slane %v2125, 4
        %v2131 = vsel %vm820, %v2130, %v2113
        %v2132 = vrot.slane %v2113, 4
        %v2133 = vsel %vm820, %v2125, %v2132
        %2136 = vrot.lane.b32.xlu0 %v2075, 8
        %v2137 = vpop.permute.xlu0 %2136
        %2138 = vrot.lane.b32.xlu0 %v2129, 8
        %v2139 = vpop.permute.xlu0 %2138
        %2144 = vrot.lane.b32.xlu0 %v2077, 16
        %v2145 = vpop.permute.xlu0 %2144
        %2146 = vrot.lane.b32.xlu0 %v2131, 16
        %v2147 = vpop.permute.xlu0 %2146
        %2152 = vrot.lane.b32.xlu0 %v2079, 24
        %v2153 = vpop.permute.xlu0 %2152
        %2154 = vrot.lane.b32.xlu0 %v2133, 24
        %v2155 = vpop.permute.xlu0 %2154
        %v2158 = vsel %vm1504, %v2073, %v2137
        %v2159 = vsel %vm1504, %v2127, %v2139
        %vm2160 = vcmask 130048
        %v2161 = vsel %vm2160, %v2158, %v2145
        %v2162 = vsel %vm2160, %v2159, %v2147
        %vm2163 = vcmask 195584
        %v2164 = vsel %vm2163, %v2161, %v2153
        %v2165 = vsel %vm2163, %v2162, %v2155
        %v2166 = vpack.c.bf16 %v2165, %v2164
        %v2167 = vld [vmem:[%s663] sm:$0xf]
        %v2168 = vld [vmem:[%s663 + $0x4] sm:$0xf]
        %v2169 = vld [vmem:[%s663 + $0x8] sm:$0xf]
        %v2170 = vld [vmem:[%s663 + $0xc] sm:$0xf]
        %v2171 = vld [vmem:[%s666] sm:$0x1]
        %v2173 = vperm.slane %v2171, 0
        %v2179 = vunpack.c.l.b16 %v2167
        %v2180 = vunpack.c.l.b16 %v2168
        %v2181 = vunpack.c.l.b16 %v2169
        %v2182 = vunpack.c.l.b16 %v2170
        %v2183 = vpack.c.b16 %v2180, %v2179
        %v2184 = vpack.c.b16 %v2182, %v2181
        %v2188 = vsel %vm733, %v2166, 0
        %2190 = vmatpush.bf16.msra.mxu0 0
        %2191 = vmatpush.bf16.msra.mxu0 0
        %2192 = vmatpush.bf16.msra.mxu0 0
        %2193 = vmatpush.bf16.msra.mxu0 0
        %2194 = vmatpush.bf16.msra.mxu0 0
        %2195 = vmatpush.bf16.msra.mxu0 0
        %2196 = vmatpush.bf16.msra.mxu0 %v2184
        %2197 = vmatpush.bf16.msra.mxu0 %v2183
        %2198 = vmatmul.bf16.gmra.mxu0 %v2188
        %v2199 = vpop.f32.mrf.mxu0
        %v2200 = vadd.f32 %v2173, %v2199
        %v2201 = vpop.f32.mrf.mxu0
        %v2202 = vadd.f32 %v2173, %v2201
        %2203 = vdwg.mxu0
        %v2204 = vadd.f32 %v2200, %v714
        %v2205 = vadd.f32 %v2202, %v715
        %v2206 = vld [vmem:[%s669] sm:$0x1]
        %v2207 = vld [vmem:[%s672] sm:$0x1]
        %v2208 = vsel %vm733, %v2204, 0.0
        %2209 = vadd.xlane.f32.xlu0 %v2208
        %v2210 = vpop.xlane.xlu0 %2209
        %v2211 = vsel %vm733, %v2205, 0.0
        %2212 = vadd.xlane.f32.xlu0 %v2211
        %v2213 = vpop.xlane.xlu0 %2212
        %v2214 = vrcp.pop 32.0
        %v2215 = vmul.f32 32.0, %v2214
        %v2216 = vsub.f32 1.0, %v2215
        %v2217 = vmul.f32 %v2214, %v2216
        %v2218 = vadd.f32 %v2214, %v2217
        %vm2219 = vweird.f32 %v2214
        %v2220 = vsel %vm2219, %v2214, %v2218
        %v2221 = vmul.f32 %v2210, %v2220
        %v2222 = vmul.f32 %v2213, %v2220
        %v2223 = vsub.f32 %v2204, %v2221
        %v2224 = vsub.f32 %v2205, %v2222
        %v2225 = vmul.f32 %v2223, %v2223
        %v2226 = vmul.f32 %v2224, %v2224
        %v2227 = vsel %vm733, %v2225, 0.0
        %2228 = vadd.xlane.f32.xlu0 %v2227
        %v2229 = vpop.xlane.xlu0 %2228
        %v2230 = vsel %vm733, %v2226, 0.0
        %2231 = vadd.xlane.f32.xlu0 %v2230
        %v2232 = vpop.xlane.xlu0 %2231
        %v2233 = vmul.f32 %v2229, %v2220
        %v2234 = vmul.f32 %v2232, %v2220
        %v2235 = vadd.f32 %v2233, 1e-05
        %v2236 = vadd.f32 %v2234, 1e-05
        %v2237 = vrsqrt.pop %v2235
        %v2238 = vmul.f32 %v2237, %v2235
        %v2239 = vmul.f32 %v2238, %v2237
        %v2240 = vmul.f32 0.5, %v2239
        %v2241 = vsub.f32 1.5, %v2240
        %v2242 = vmul.f32 %v2237, %v2241
        %vm2243 = vweird.f32 %v2235
        %vm2244 = vweird.f32 %v2237
        %vm2245 = vmor %vm2243, %vm2244
        %v2246 = vsel %vm2245, %v2237, %v2242
        %v2247 = vrsqrt.pop %v2236
        %v2248 = vmul.f32 %v2247, %v2236
        %v2249 = vmul.f32 %v2248, %v2247
        %v2250 = vmul.f32 0.5, %v2249
        %v2251 = vsub.f32 1.5, %v2250
        %v2252 = vmul.f32 %v2247, %v2251
        %vm2253 = vweird.f32 %v2236
        %vm2254 = vweird.f32 %v2247
        %vm2255 = vmor %vm2253, %vm2254
        %v2256 = vsel %vm2255, %v2247, %v2252
        %v2257 = vmul.f32 %v2223, %v2246
        %v2258 = vmul.f32 %v2224, %v2256
        %v2260 = vperm.slane %v2206, 0
        %v2262 = vmul.f32 %v2257, %v2260
        %v2263 = vmul.f32 %v2258, %v2260
        %v2265 = vperm.slane %v2207, 0
        %v2267 = vadd.f32 %v2262, %v2265
        %v2268 = vadd.f32 %v2263, %v2265
        %v2269 = vpack.c.bf16 %v2268, %v2267
        %v2270 = vld [vmem:[%s677] sm:$0xf]
        %v2271 = vld [vmem:[%s677 + $0x4] sm:$0xf]
        %v2272 = vld [vmem:[%s677 + $0x8] sm:$0xf]
        %v2273 = vld [vmem:[%s677 + $0xc] sm:$0xf]
        %v2274 = vld [vmem:[%s680] sm:$0x1]
        %v2276 = vperm.slane %v2274, 0
        %v2282 = vunpack.c.l.b16 %v2270
        %v2283 = vunpack.c.l.b16 %v2271
        %v2284 = vunpack.c.l.b16 %v2272
        %v2285 = vunpack.c.l.b16 %v2273
        %v2286 = vpack.c.b16 %v2283, %v2282
        %v2287 = vpack.c.b16 %v2285, %v2284
        %v2291 = vsel %vm733, %v2269, 0
        %2293 = vmatpush.bf16.msra.mxu0 0
        %2294 = vmatpush.bf16.msra.mxu0 0
        %2295 = vmatpush.bf16.msra.mxu0 0
        %2296 = vmatpush.bf16.msra.mxu0 0
        %2297 = vmatpush.bf16.msra.mxu0 0
        %2298 = vmatpush.bf16.msra.mxu0 0
        %2299 = vmatpush.bf16.msra.mxu0 %v2287
        %2300 = vmatpush.bf16.msra.mxu0 %v2286
        %2301 = vmatmul.bf16.gmra.mxu0 %v2291
        %v2302 = vpop.f32.mrf.mxu0
        %v2303 = vadd.f32 %v2276, %v2302
        %v2304 = vpop.f32.mrf.mxu0
        %v2305 = vadd.f32 %v2276, %v2304
        %2306 = vdwg.mxu0
        %v2307 = vmax.f32 %v2303, 0.0
        %v2308 = vmax.f32 %v2305, 0.0
        %v2309 = vpack.c.bf16 %v2308, %v2307
        %v2310 = vld [vmem:[%s685] sm:$0xf]
        %v2311 = vld [vmem:[%s685 + $0x4] sm:$0xf]
        %v2312 = vld [vmem:[%s685 + $0x8] sm:$0xf]
        %v2313 = vld [vmem:[%s685 + $0xc] sm:$0xf]
        %v2314 = vld [vmem:[%s685 + $0x10] sm:$0xf]
        %v2315 = vld [vmem:[%s685 + $0x14] sm:$0xf]
        %v2316 = vld [vmem:[%s685 + $0x18] sm:$0xf]
        %v2317 = vld [vmem:[%s685 + $0x1c] sm:$0xf]
        %v2318 = vld [vmem:[%s685 + $0x20] sm:$0xf]
        %v2319 = vld [vmem:[%s685 + $0x24] sm:$0xf]
        %v2320 = vld [vmem:[%s685 + $0x28] sm:$0xf]
        %v2321 = vld [vmem:[%s685 + $0x2c] sm:$0xf]
        %v2322 = vld [vmem:[%s685 + $0x30] sm:$0xf]
        %v2323 = vld [vmem:[%s685 + $0x34] sm:$0xf]
        %v2324 = vld [vmem:[%s685 + $0x38] sm:$0xf]
        %v2325 = vld [vmem:[%s685 + $0x3c] sm:$0xf]
        %v2326 = vld [vmem:[%s688] sm:$0x1]
        %v2328 = vperm.slane %v2326, 0
        %v2346 = vunpack.c.l.b16 %v2310
        %v2347 = vunpack.c.l.b16 %v2311
        %v2348 = vunpack.c.l.b16 %v2312
        %v2349 = vunpack.c.l.b16 %v2313
        %v2350 = vunpack.c.l.b16 %v2314
        %v2351 = vunpack.c.l.b16 %v2315
        %v2352 = vunpack.c.l.b16 %v2316
        %v2353 = vunpack.c.l.b16 %v2317
        %v2354 = vunpack.c.l.b16 %v2318
        %v2355 = vunpack.c.l.b16 %v2319
        %v2356 = vunpack.c.l.b16 %v2320
        %v2357 = vunpack.c.l.b16 %v2321
        %v2358 = vunpack.c.l.b16 %v2322
        %v2359 = vunpack.c.l.b16 %v2323
        %v2360 = vunpack.c.l.b16 %v2324
        %v2361 = vunpack.c.l.b16 %v2325
        %v2362 = vpack.c.b16 %v2347, %v2346
        %v2363 = vpack.c.b16 %v2349, %v2348
        %v2364 = vpack.c.b16 %v2351, %v2350
        %v2365 = vpack.c.b16 %v2353, %v2352
        %v2366 = vpack.c.b16 %v2355, %v2354
        %v2367 = vpack.c.b16 %v2357, %v2356
        %v2368 = vpack.c.b16 %v2359, %v2358
        %v2369 = vpack.c.b16 %v2361, %v2360
        %2378 = vmatpush.bf16.msra.mxu0 %v2369
        %2379 = vmatpush.bf16.msra.mxu0 %v2368
        %2380 = vmatpush.bf16.msra.mxu0 %v2367
        %2381 = vmatpush.bf16.msra.mxu0 %v2366
        %2382 = vmatpush.bf16.msra.mxu0 %v2365
        %2383 = vmatpush.bf16.msra.mxu0 %v2364
        %2384 = vmatpush.bf16.msra.mxu0 %v2363
        %2385 = vmatpush.bf16.msra.mxu0 %v2362
        %2386 = vmatmul.bf16.gmra.mxu0 %v2309
        %v2387 = vpop.f32.mrf.mxu0
        %v2388 = vadd.f32 %v2328, %v2387
        %v2389 = vpop.f32.mrf.mxu0
        %v2390 = vadd.f32 %v2328, %v2389
        %2391 = vdwg.mxu0
        %v2392 = vadd.f32 %v2388, %v2267
        %v2393 = vadd.f32 %v2390, %v2268
        %v2394 = vld [vmem:[%s691] sm:$0x1]
        %v2395 = vld [vmem:[%s694] sm:$0x1]
        %v2396 = vsel %vm733, %v2392, 0.0
        %2397 = vadd.xlane.f32.xlu0 %v2396
        %v2398 = vpop.xlane.xlu0 %2397
        %v2399 = vsel %vm733, %v2393, 0.0
        %2400 = vadd.xlane.f32.xlu0 %v2399
        %v2401 = vpop.xlane.xlu0 %2400
        %v2402 = vmul.f32 %v2398, %v2220
        %v2403 = vmul.f32 %v2401, %v2220
        %v2404 = vsub.f32 %v2392, %v2402
        %v2405 = vsub.f32 %v2393, %v2403
        %v2406 = vmul.f32 %v2404, %v2404
        %v2407 = vmul.f32 %v2405, %v2405
        %v2408 = vsel %vm733, %v2406, 0.0
        %2409 = vadd.xlane.f32.xlu0 %v2408
        %v2410 = vpop.xlane.xlu0 %2409
        %v2411 = vsel %vm733, %v2407, 0.0
        %2412 = vadd.xlane.f32.xlu0 %v2411
        %v2413 = vpop.xlane.xlu0 %2412
        %v2414 = vmul.f32 %v2410, %v2220
        %v2415 = vmul.f32 %v2413, %v2220
        %v2416 = vadd.f32 %v2414, 1e-05
        %v2417 = vadd.f32 %v2415, 1e-05
        %v2418 = vrsqrt.pop %v2416
        %v2419 = vmul.f32 %v2418, %v2416
        %v2420 = vmul.f32 %v2419, %v2418
        %v2421 = vmul.f32 0.5, %v2420
        %v2422 = vsub.f32 1.5, %v2421
        %v2423 = vmul.f32 %v2418, %v2422
        %vm2424 = vweird.f32 %v2416
        %vm2425 = vweird.f32 %v2418
        %vm2426 = vmor %vm2424, %vm2425
        %v2427 = vsel %vm2426, %v2418, %v2423
        %v2428 = vrsqrt.pop %v2417
        %v2429 = vmul.f32 %v2428, %v2417
        %v2430 = vmul.f32 %v2429, %v2428
        %v2431 = vmul.f32 0.5, %v2430
        %v2432 = vsub.f32 1.5, %v2431
        %v2433 = vmul.f32 %v2428, %v2432
        %vm2434 = vweird.f32 %v2417
        %vm2435 = vweird.f32 %v2428
        %vm2436 = vmor %vm2434, %vm2435
        %v2437 = vsel %vm2436, %v2428, %v2433
        %v2438 = vmul.f32 %v2404, %v2427
        %v2439 = vmul.f32 %v2405, %v2437
        %v2441 = vperm.slane %v2394, 0
        %v2443 = vmul.f32 %v2438, %v2441
        %v2444 = vmul.f32 %v2439, %v2441
        %v2446 = vperm.slane %v2395, 0
        %v2448 = vadd.f32 %v2443, %v2446
        %v2449 = vadd.f32 %v2444, %v2446
        %2450 = vst.msk [vmem:[#allocation2] sm:$0xff] %vm733, %v2448
        %2451 = vst.msk [vmem:[#allocation2 + $0x8] sm:$0xff] %vm733, %v2449
        // Predicated region
        $region81: #{tpu_custom_call.1} parent=75 // pred_check
          %p2452 = pneg %p420
        $region82: #{tpu_custom_call.1} parent=75 // pred_check_branch
          %2454 = sbr.rel (%p2452) target = $region84
        $region83: #{tpu_custom_call.1} parent=75 // pred_region
          %s2455 = smul.u32 2, %s30
          %2457 = vsyncadd [#allocation3], 0
          %s2458 = smul.addr %s2455, 8
          %s2459 = scalar_lea.hbm %s14, %s2458
          %s2460 = sshll.u32 [#allocation2], 4
          %s2461 = int_to_ptr.vmem [resolvable:$true] %s2460
          %s2462 = sshll.u32 %s2459, 4
          %s2463 = int_to_ptr.hbm [resolvable:$true] %s2462
          %2468 = dma.vmem_to_hbm [thread:$0]  %s2461, 256, %s2463, [#allocation3], 128, 128, 8
        $region84: #{tpu_custom_call.1} parent=75 // pred_fallthru
          _
        // Predicated region
        $region85: #{tpu_custom_call.1} parent=75 // pred_check
          %p2469 = pneg %p420
        $region86: #{tpu_custom_call.1} parent=75 // pred_check_branch
          %2471 = sbr.rel (%p2469) target = $region88
        $region87: #{tpu_custom_call.1} parent=75 // pred_region
          %2473 = dma.done [#allocation3], 256
        $region88: #{tpu_custom_call.1} parent=75 // pred_fallthru
          _
      $region76: #{tpu_custom_call.1} parent=5 // pred_fallthru
        _
      %p2474 = scmp.le.s32.totalorder 2, %s21
      // Predicated region
      $region89: #{tpu_custom_call.1} parent=5 // pred_check
        %p2475 = pneg %p2474
      $region90: #{tpu_custom_call.1} parent=5 // pred_check_branch
        %2477 = sbr.rel (%p2475) target = $region92
      $region91: #{tpu_custom_call.1} parent=5 // pred_region
        %s2478 = ssub.s32 %s21, 2
      $region92: #{tpu_custom_call.1} parent=5 // pred_fallthru
        _
    $region6: #{tpu_custom_call.1} parent=1 // loop_footer
      %s25 = sadd.s32 1, %s21
    $region7: #{tpu_custom_call.1} parent=1 // loop_footer_branch
      %20 = sbr.rel target = $region3
    $region8: #{tpu_custom_call.1} parent=1 // loop_exit
      _
    %2479 = vsyncpa [#allocation3], 1
    %s2480 = scalar_lea.sflag [#allocation3], 1
    %2481 = vsyncpa %s2480, 1

</llo_original>
